<compile_context>
chip_gen: v7x
topology: tpu7x:2x2x1
jax: 0.10.0
libtpu: 0.0.40
codegen_flags: <defaults>
</compile_context>

<pallas_src>
import functools
import math

import jax
import jax.numpy as jnp
from jax import lax
from jax.experimental import pallas as pl
from jax.experimental.pallas import tpu as pltpu


# Contract the last dim of both operands: A @ B^T without a materialized
# transpose (no per-head XLU transpose + relayout).
_NT_DIMS = (((1,), (1,)), ((), ()))


def _attn_kernel(x_ref, wqkv_ref, bqkv_ref, wp_ref, bp_ref, o_ref, *,
                 n_head, head_size, seq_len, batch_per_block):
    T = seq_len
    hs = head_size
    C = n_head * hs

    # bf16 MXU operands, f32 accumulation.  Weights arrive pre-cast to bf16.
    x_bf = x_ref[...].astype(jnp.bfloat16)               # (M, C)
    wqkv = wqkv_ref[...]                                  # (C, 3C) bf16
    wp = wp_ref[...]                                      # (C, C)  bf16

    # Fused QKV projection: one MXU matmul with N = 3C; f32 accumulate + bias.
    qkv = jnp.dot(x_bf, wqkv,
                  preferred_element_type=jnp.float32) + bqkv_ref[0]
    q = qkv[:, :C].astype(jnp.bfloat16)   # already pre-scaled by 1/sqrt(hs)
    k = qkv[:, C:2 * C].astype(jnp.bfloat16)
    v = qkv[:, 2 * C:].astype(jnp.bfloat16)

    # Additive float tril mask (exactly what F.sdpa does with a float mask):
    # +1.0 on/below the diagonal, 0.0 above.  Generated in-kernel (VPU).
    rows = lax.broadcasted_iota(jnp.int32, (T, T), 0)
    cols = lax.broadcasted_iota(jnp.int32, (T, T), 1)
    add_mask = (rows >= cols).astype(jnp.float32)

    bp = bp_ref[0]                                        # (C,) f32

    for b in range(batch_per_block):                      # static (unrolled)
        r0 = b * T
        y_b = jnp.zeros((T, C), jnp.float32)
        for h in range(n_head):                           # static (unrolled)
            c0 = h * hs
            qh = q[r0:r0 + T, c0:c0 + hs]                 # (T, hs) bf16
            kh = k[r0:r0 + T, c0:c0 + hs]                 # (T, hs) bf16
            vh = v[r0:r0 + T, c0:c0 + hs]                 # (T, hs) bf16

            # q @ k^T as an NT dot — no transposed vreg materialized.
            s = lax.dot_general(qh, kh, _NT_DIMS,
                                preferred_element_type=jnp.float32) + add_mask

            # softmax in f32; reciprocal on the EUP (approx, ample tolerance).
            m = jnp.max(s, axis=-1, keepdims=True)
            e = jnp.exp(s - m)
            l = jnp.sum(e, axis=-1, keepdims=True)
            p = (e * pl.reciprocal(l, approx=True)).astype(jnp.bfloat16)

            pv = jnp.dot(p, vh, preferred_element_type=jnp.float32)  # (T, hs)
            # Output projection folded into the head loop: K-sliced MXU
            # accumulation, no concat relayouts.
            y_b = y_b + jnp.dot(pv.astype(jnp.bfloat16), wp[c0:c0 + hs, :],
                                preferred_element_type=jnp.float32)   # (T, C)

        # TODO(synk): dropout omitted (eval-mode forward, p=0).
        o_ref[r0:r0 + T, :] = (y_b + bp).astype(o_ref.dtype)


def _num_tensorcores_per_chip():
    # v7x has 2 TensorCores per chip; v5e/v6e have 1.
    try:
        kind = jax.devices()[0].device_kind.lower()
    except Exception:
        return 1
    return 2 if "v7" in kind else 1


def prepare_params(params, n_head):
    """One-time (parameter-load time) weight prep, hoisted off the per-call
    path: fold 1/sqrt(hs) into the query projection, fuse QKV into a single
    (C, 3C) weight, transpose to (in, out), and cast matmul weights to bf16
    (biases stay f32; they are added post-accumulation)."""
    wq, bq, wk, bk, wv, bv, wp, bp = params
    C = wq.shape[0]
    hs = C // n_head
    scale = 1.0 / math.sqrt(hs)
    wqkv = jnp.concatenate([wq.T * scale, wk.T, wv.T],
                           axis=1).astype(jnp.bfloat16)               # (C, 3C)
    bqkv = jnp.concatenate([bq * scale, bk, bv]).reshape(1, 3 * C)    # (1, 3C)
    wp_t = wp.T.astype(jnp.bfloat16)                                  # (C, C)
    bp2 = bp.reshape(1, C)                                            # (1, C)
    return (wqkv, bqkv.astype(jnp.float32), wp_t, bp2.astype(jnp.float32))


def self_attention(x, prepared, n_head):
    B, T, C = x.shape
    hs = C // n_head
    wqkv, bqkv, wp_t, bp2 = prepared

    # Grid choice: fold batch into the matmul M dim.  Only split across the
    # two v7x TensorCores when each block carries enough rows (>= 512) to
    # amortize the ~0.35us per-grid-step overhead and the duplicated weight
    # DMAs; tiny problems (B=2, T=8) run as a single grid step.
    n_tc = _num_tensorcores_per_chip()
    num_blocks = 1
    if n_tc > 1 and B % n_tc == 0 and (B // n_tc) * T >= 512:
        num_blocks = n_tc
    bpb = B // num_blocks
    m_blk = bpb * T

    x2 = x.reshape(B * T, C)

    kernel = functools.partial(_attn_kernel, n_head=n_head, head_size=hs,
                               seq_len=T, batch_per_block=bpb)

    out2 = pl.pallas_call(
        kernel,
        out_shape=jax.ShapeDtypeStruct((B * T, C), x.dtype),
        grid_spec=pltpu.PrefetchScalarGridSpec(
            num_scalar_prefetch=0,
            grid=(num_blocks,),
            in_specs=[
                pl.BlockSpec((m_blk, C), lambda i: (i, 0)),      # x slab (f32)
                # Grid-invariant weight/bias blocks (index_map always (0, 0));
                # with num_blocks == 1 there is nothing to pipeline.
                pl.BlockSpec((C, 3 * C), lambda i: (0, 0)),      # W_qkv fused, bf16
                pl.BlockSpec((1, 3 * C), lambda i: (0, 0)),      # b_qkv fused, f32
                pl.BlockSpec((C, C), lambda i: (0, 0)),          # W_proj^T, bf16
                pl.BlockSpec((1, C), lambda i: (0, 0)),          # b_proj, f32
            ],
            out_specs=pl.BlockSpec((m_blk, C), lambda i: (i, 0)),
        ),
        compiler_params=pltpu.CompilerParams(
            dimension_semantics=("parallel",)),
    )(x2, wqkv, bqkv, wp_t, bp2)

    return out2.reshape(B, T, C)


def _reference(x, params, n_head):
    # Pure-JAX f32 reference mirroring the PyTorch forward (eval mode).
    B, T, C = x.shape
    hs = C // n_head
    wq, bq, wk, bk, wv, bv, wp, bp = params
    q = (x @ wq.T + bq).reshape(B, T, n_head, hs).transpose(0, 2, 1, 3)
    k = (x @ wk.T + bk).reshape(B, T, n_head, hs).transpose(0, 2, 1, 3)
    v = (x @ wv.T + bv).reshape(B, T, n_head, hs).transpose(0, 2, 1, 3)
    mask = jnp.tril(jnp.ones((T, T), dtype=jnp.float32))
    scores = jnp.einsum('bhtd,bhsd->bhts', q, k) / math.sqrt(hs)
    scores = scores + mask[None, None, :, :]   # additive float mask (sdpa semantics)
    p = jax.nn.softmax(scores, axis=-1)
    out = jnp.einsum('bhts,bhsd->bhtd', p, v).transpose(0, 2, 1, 3).reshape(B, T, C)
    return out @ wp.T + bp


def init_params(key, n_embd):
    # PyTorch nn.Linear default: U(-1/sqrt(in), 1/sqrt(in)) for W and b.
    bound = 1.0 / math.sqrt(n_embd)
    keys = jax.random.split(key, 8)
    params = []
    for i in range(4):
        w = jax.random.uniform(keys[2 * i], (n_embd, n_embd),
                               minval=-bound, maxval=bound, dtype=jnp.float32)
        b = jax.random.uniform(keys[2 * i + 1], (n_embd,),
                               minval=-bound, maxval=bound, dtype=jnp.float32)
        params += [w, b]
    return tuple(params)


if __name__ == "__main__":
    # config: n_embd=32, n_head=4, dropout=0.0 ; input: B=2, T=8, C=32
    B, T, C, n_head = 2, 8, 32, 4
    key = jax.random.PRNGKey(0)
    kx, kp = jax.random.split(key)
    x = jax.random.normal(kx, (B, T, C), dtype=jnp.float32)
    params = init_params(kp, C)

    prepared = prepare_params(params, n_head)    # one-time weight prep
    out = self_attention(x, prepared, n_head)
    out = jax.block_until_ready(out)

    ref = _reference(x, params, n_head)
    assert out.shape == (B, T, C)
    # bf16 MXU operands (f32 accumulation) + approx EUP reciprocal: observed
    # error ~1e-3..1e-2 relative vs the f32 reference.
    assert jnp.allclose(out, ref, atol=2e-2, rtol=2e-2), "mismatch vs reference"
    print("KERNEL_OK")
</pallas_src>

<mosaic_0001>
module attributes {stable_mosaic.version = 11 : i64} {
  func.func @_attn_kernel(%arg0: i32, %arg1: memref<16x32xf32, #tpu.memory_space<vmem>>, %arg2: memref<32x96xbf16, #tpu.memory_space<vmem>>, %arg3: memref<1x96xf32, #tpu.memory_space<vmem>>, %arg4: memref<32x32xbf16, #tpu.memory_space<vmem>>, %arg5: memref<1x32xf32, #tpu.memory_space<vmem>>, %arg6: memref<16x32xf32, #tpu.memory_space<vmem>>) attributes {dimension_semantics = [#tpu.dimension_semantics<parallel>], iteration_bounds = array<i64: 1>, scalar_prefetch = 0 : i64, scratch_operands = 0 : i64, tpu.core_type = #tpu.core_type<tc>, window_params = [{transform_indices = @transform_0, window_bounds = array<i64: 16, 32>}, {pipeline_mode = #tpu.pipeline_mode<synchronous>, transform_indices = @transform_1, window_bounds = array<i64: 32, 96>}, {pipeline_mode = #tpu.pipeline_mode<synchronous>, transform_indices = @transform_2, window_bounds = array<i64: 1, 96>}, {pipeline_mode = #tpu.pipeline_mode<synchronous>, transform_indices = @transform_3, window_bounds = array<i64: 32, 32>}, {pipeline_mode = #tpu.pipeline_mode<synchronous>, transform_indices = @transform_4, window_bounds = array<i64: 1, 32>}, {transform_indices = @transform_5, window_bounds = array<i64: 16, 32>}]} {
    %c0 = arith.constant 0 : index
    %c0_0 = arith.constant 0 : index
    %0 = vector.load %arg1[%c0, %c0_0] : memref<16x32xf32, #tpu.memory_space<vmem>>, vector<16x32xf32>
    %1 = arith.truncf %0 : vector<16x32xf32> to vector<16x32xbf16>
    %c0_1 = arith.constant 0 : index
    %c0_2 = arith.constant 0 : index
    %2 = vector.load %arg2[%c0_1, %c0_2] : memref<32x96xbf16, #tpu.memory_space<vmem>>, vector<32x96xbf16>
    %c0_3 = arith.constant 0 : index
    %c0_4 = arith.constant 0 : index
    %3 = vector.load %arg4[%c0_3, %c0_4] : memref<32x32xbf16, #tpu.memory_space<vmem>>, vector<32x32xbf16>
    %cst = arith.constant dense<0.000000e+00> : vector<16x96xf32>
    %4 = tpu.matmul %1, %2, %cst {dimension_numbers = #tpu.dot_dimension_numbers<[1], [0], [0], [1], [0, 0, 1, 1], [], []>} : vector<16x32xbf16>, vector<32x96xbf16>, vector<16x96xf32> -> vector<16x96xf32>
    %c0_5 = arith.constant 0 : index
    %c0_6 = arith.constant 0 : index
    %5 = vector.load %arg3[%c0_5, %c0_6] : memref<1x96xf32, #tpu.memory_space<vmem>>, vector<1x96xf32>
    %6 = vector.shape_cast %5 : vector<1x96xf32> to vector<96xf32>
    %7 = vector.shape_cast %6 : vector<96xf32> to vector<1x96xf32>
    %8 = vector.broadcast %7 : vector<1x96xf32> to vector<16x96xf32>
    %9 = arith.addf %4, %8 : vector<16x96xf32>
    %10 = vector.extract_strided_slice %9 {offsets = [0, 0], sizes = [16, 32], strides = [1, 1]} : vector<16x96xf32> to vector<16x32xf32>
    %11 = arith.truncf %10 : vector<16x32xf32> to vector<16x32xbf16>
    %12 = vector.extract_strided_slice %9 {offsets = [0, 32], sizes = [16, 32], strides = [1, 1]} : vector<16x96xf32> to vector<16x32xf32>
    %13 = arith.truncf %12 : vector<16x32xf32> to vector<16x32xbf16>
    %14 = vector.extract_strided_slice %9 {offsets = [0, 64], sizes = [16, 32], strides = [1, 1]} : vector<16x96xf32> to vector<16x32xf32>
    %15 = arith.truncf %14 : vector<16x32xf32> to vector<16x32xbf16>
    %16 = tpu.iota {dimensions = array<i32: 0>} : vector<8x8xi32>
    %17 = tpu.iota {dimensions = array<i32: 1>} : vector<8x8xi32>
    %18 = arith.cmpi sge, %16, %17 : vector<8x8xi32>
    %19 = arith.extui %18 : vector<8x8xi1> to vector<8x8xi32>
    %20 = arith.sitofp %19 : vector<8x8xi32> to vector<8x8xf32>
    %c0_7 = arith.constant 0 : index
    %c0_8 = arith.constant 0 : index
    %21 = vector.load %arg5[%c0_7, %c0_8] : memref<1x32xf32, #tpu.memory_space<vmem>>, vector<1x32xf32>
    %22 = vector.shape_cast %21 : vector<1x32xf32> to vector<32xf32>
    %cst_9 = arith.constant 0.000000e+00 : f32
    %23 = vector.broadcast %cst_9 : f32 to vector<8x32xf32>
    %24 = vector.extract_strided_slice %11 {offsets = [0, 0], sizes = [8, 8], strides = [1, 1]} : vector<16x32xbf16> to vector<8x8xbf16>
    %25 = vector.extract_strided_slice %13 {offsets = [0, 0], sizes = [8, 8], strides = [1, 1]} : vector<16x32xbf16> to vector<8x8xbf16>
    %26 = vector.extract_strided_slice %15 {offsets = [0, 0], sizes = [8, 8], strides = [1, 1]} : vector<16x32xbf16> to vector<8x8xbf16>
    %cst_10 = arith.constant dense<0.000000e+00> : vector<8x8xf32>
    %27 = tpu.matmul %24, %25, %cst_10 {dimension_numbers = #tpu.dot_dimension_numbers<[1], [1], [0], [0], [0, 0, 1, 0], [], []>} : vector<8x8xbf16>, vector<8x8xbf16>, vector<8x8xf32> -> vector<8x8xf32>
    %28 = arith.addf %27, %20 : vector<8x8xf32>
    %cst_11 = arith.constant dense<0xFF800000> : vector<8xf32>
    %29 = vector.multi_reduction <maximumf>, %28, %cst_11 [1] : vector<8x8xf32> to vector<8xf32>
    %30 = vector.shape_cast %29 : vector<8xf32> to vector<8x1xf32>
    %31 = vector.broadcast %30 : vector<8x1xf32> to vector<8x8xf32>
    %32 = arith.subf %28, %31 : vector<8x8xf32>
    %33 = math.exp %32 : vector<8x8xf32>
    %cst_12 = arith.constant dense<0.000000e+00> : vector<8xf32>
    %34 = vector.multi_reduction <add>, %33, %cst_12 [1] : vector<8x8xf32> to vector<8xf32>
    %35 = vector.shape_cast %34 : vector<8xf32> to vector<8x1xf32>
    %36 = tpu.reciprocal %35 {approx = true} : vector<8x1xf32> -> vector<8x1xf32>
    %37 = vector.broadcast %36 : vector<8x1xf32> to vector<8x8xf32>
    %38 = arith.mulf %33, %37 : vector<8x8xf32>
    %39 = arith.truncf %38 : vector<8x8xf32> to vector<8x8xbf16>
    %cst_13 = arith.constant dense<0.000000e+00> : vector<8x8xf32>
    %40 = tpu.matmul %39, %26, %cst_13 {dimension_numbers = #tpu.dot_dimension_numbers<[1], [0], [0], [1], [0, 0, 1, 1], [], []>} : vector<8x8xbf16>, vector<8x8xbf16>, vector<8x8xf32> -> vector<8x8xf32>
    %41 = arith.truncf %40 : vector<8x8xf32> to vector<8x8xbf16>
    %42 = vector.extract_strided_slice %3 {offsets = [0, 0], sizes = [8, 32], strides = [1, 1]} : vector<32x32xbf16> to vector<8x32xbf16>
    %cst_14 = arith.constant dense<0.000000e+00> : vector<8x32xf32>
    %43 = tpu.matmul %41, %42, %cst_14 {dimension_numbers = #tpu.dot_dimension_numbers<[1], [0], [0], [1], [0, 0, 1, 1], [], []>} : vector<8x8xbf16>, vector<8x32xbf16>, vector<8x32xf32> -> vector<8x32xf32>
    %44 = arith.addf %23, %43 : vector<8x32xf32>
    %45 = vector.extract_strided_slice %11 {offsets = [0, 8], sizes = [8, 8], strides = [1, 1]} : vector<16x32xbf16> to vector<8x8xbf16>
    %46 = vector.extract_strided_slice %13 {offsets = [0, 8], sizes = [8, 8], strides = [1, 1]} : vector<16x32xbf16> to vector<8x8xbf16>
    %47 = vector.extract_strided_slice %15 {offsets = [0, 8], sizes = [8, 8], strides = [1, 1]} : vector<16x32xbf16> to vector<8x8xbf16>
    %cst_15 = arith.constant dense<0.000000e+00> : vector<8x8xf32>
    %48 = tpu.matmul %45, %46, %cst_15 {dimension_numbers = #tpu.dot_dimension_numbers<[1], [1], [0], [0], [0, 0, 1, 0], [], []>} : vector<8x8xbf16>, vector<8x8xbf16>, vector<8x8xf32> -> vector<8x8xf32>
    %49 = arith.addf %48, %20 : vector<8x8xf32>
    %cst_16 = arith.constant dense<0xFF800000> : vector<8xf32>
    %50 = vector.multi_reduction <maximumf>, %49, %cst_16 [1] : vector<8x8xf32> to vector<8xf32>
    %51 = vector.shape_cast %50 : vector<8xf32> to vector<8x1xf32>
    %52 = vector.broadcast %51 : vector<8x1xf32> to vector<8x8xf32>
    %53 = arith.subf %49, %52 : vector<8x8xf32>
    %54 = math.exp %53 : vector<8x8xf32>
    %cst_17 = arith.constant dense<0.000000e+00> : vector<8xf32>
    %55 = vector.multi_reduction <add>, %54, %cst_17 [1] : vector<8x8xf32> to vector<8xf32>
    %56 = vector.shape_cast %55 : vector<8xf32> to vector<8x1xf32>
    %57 = tpu.reciprocal %56 {approx = true} : vector<8x1xf32> -> vector<8x1xf32>
    %58 = vector.broadcast %57 : vector<8x1xf32> to vector<8x8xf32>
    %59 = arith.mulf %54, %58 : vector<8x8xf32>
    %60 = arith.truncf %59 : vector<8x8xf32> to vector<8x8xbf16>
    %cst_18 = arith.constant dense<0.000000e+00> : vector<8x8xf32>
    %61 = tpu.matmul %60, %47, %cst_18 {dimension_numbers = #tpu.dot_dimension_numbers<[1], [0], [0], [1], [0, 0, 1, 1], [], []>} : vector<8x8xbf16>, vector<8x8xbf16>, vector<8x8xf32> -> vector<8x8xf32>
    %62 = arith.truncf %61 : vector<8x8xf32> to vector<8x8xbf16>
    %63 = vector.extract_strided_slice %3 {offsets = [8, 0], sizes = [8, 32], strides = [1, 1]} : vector<32x32xbf16> to vector<8x32xbf16>
    %cst_19 = arith.constant dense<0.000000e+00> : vector<8x32xf32>
    %64 = tpu.matmul %62, %63, %cst_19 {dimension_numbers = #tpu.dot_dimension_numbers<[1], [0], [0], [1], [0, 0, 1, 1], [], []>} : vector<8x8xbf16>, vector<8x32xbf16>, vector<8x32xf32> -> vector<8x32xf32>
    %65 = arith.addf %44, %64 : vector<8x32xf32>
    %66 = vector.extract_strided_slice %11 {offsets = [0, 16], sizes = [8, 8], strides = [1, 1]} : vector<16x32xbf16> to vector<8x8xbf16>
    %67 = vector.extract_strided_slice %13 {offsets = [0, 16], sizes = [8, 8], strides = [1, 1]} : vector<16x32xbf16> to vector<8x8xbf16>
    %68 = vector.extract_strided_slice %15 {offsets = [0, 16], sizes = [8, 8], strides = [1, 1]} : vector<16x32xbf16> to vector<8x8xbf16>
    %cst_20 = arith.constant dense<0.000000e+00> : vector<8x8xf32>
    %69 = tpu.matmul %66, %67, %cst_20 {dimension_numbers = #tpu.dot_dimension_numbers<[1], [1], [0], [0], [0, 0, 1, 0], [], []>} : vector<8x8xbf16>, vector<8x8xbf16>, vector<8x8xf32> -> vector<8x8xf32>
    %70 = arith.addf %69, %20 : vector<8x8xf32>
    %cst_21 = arith.constant dense<0xFF800000> : vector<8xf32>
    %71 = vector.multi_reduction <maximumf>, %70, %cst_21 [1] : vector<8x8xf32> to vector<8xf32>
    %72 = vector.shape_cast %71 : vector<8xf32> to vector<8x1xf32>
    %73 = vector.broadcast %72 : vector<8x1xf32> to vector<8x8xf32>
    %74 = arith.subf %70, %73 : vector<8x8xf32>
    %75 = math.exp %74 : vector<8x8xf32>
    %cst_22 = arith.constant dense<0.000000e+00> : vector<8xf32>
    %76 = vector.multi_reduction <add>, %75, %cst_22 [1] : vector<8x8xf32> to vector<8xf32>
    %77 = vector.shape_cast %76 : vector<8xf32> to vector<8x1xf32>
    %78 = tpu.reciprocal %77 {approx = true} : vector<8x1xf32> -> vector<8x1xf32>
    %79 = vector.broadcast %78 : vector<8x1xf32> to vector<8x8xf32>
    %80 = arith.mulf %75, %79 : vector<8x8xf32>
    %81 = arith.truncf %80 : vector<8x8xf32> to vector<8x8xbf16>
    %cst_23 = arith.constant dense<0.000000e+00> : vector<8x8xf32>
    %82 = tpu.matmul %81, %68, %cst_23 {dimension_numbers = #tpu.dot_dimension_numbers<[1], [0], [0], [1], [0, 0, 1, 1], [], []>} : vector<8x8xbf16>, vector<8x8xbf16>, vector<8x8xf32> -> vector<8x8xf32>
    %83 = arith.truncf %82 : vector<8x8xf32> to vector<8x8xbf16>
    %84 = vector.extract_strided_slice %3 {offsets = [16, 0], sizes = [8, 32], strides = [1, 1]} : vector<32x32xbf16> to vector<8x32xbf16>
    %cst_24 = arith.constant dense<0.000000e+00> : vector<8x32xf32>
    %85 = tpu.matmul %83, %84, %cst_24 {dimension_numbers = #tpu.dot_dimension_numbers<[1], [0], [0], [1], [0, 0, 1, 1], [], []>} : vector<8x8xbf16>, vector<8x32xbf16>, vector<8x32xf32> -> vector<8x32xf32>
    %86 = arith.addf %65, %85 : vector<8x32xf32>
    %87 = vector.extract_strided_slice %11 {offsets = [0, 24], sizes = [8, 8], strides = [1, 1]} : vector<16x32xbf16> to vector<8x8xbf16>
    %88 = vector.extract_strided_slice %13 {offsets = [0, 24], sizes = [8, 8], strides = [1, 1]} : vector<16x32xbf16> to vector<8x8xbf16>
    %89 = vector.extract_strided_slice %15 {offsets = [0, 24], sizes = [8, 8], strides = [1, 1]} : vector<16x32xbf16> to vector<8x8xbf16>
    %cst_25 = arith.constant dense<0.000000e+00> : vector<8x8xf32>
    %90 = tpu.matmul %87, %88, %cst_25 {dimension_numbers = #tpu.dot_dimension_numbers<[1], [1], [0], [0], [0, 0, 1, 0], [], []>} : vector<8x8xbf16>, vector<8x8xbf16>, vector<8x8xf32> -> vector<8x8xf32>
    %91 = arith.addf %90, %20 : vector<8x8xf32>
    %cst_26 = arith.constant dense<0xFF800000> : vector<8xf32>
    %92 = vector.multi_reduction <maximumf>, %91, %cst_26 [1] : vector<8x8xf32> to vector<8xf32>
    %93 = vector.shape_cast %92 : vector<8xf32> to vector<8x1xf32>
    %94 = vector.broadcast %93 : vector<8x1xf32> to vector<8x8xf32>
    %95 = arith.subf %91, %94 : vector<8x8xf32>
    %96 = math.exp %95 : vector<8x8xf32>
    %cst_27 = arith.constant dense<0.000000e+00> : vector<8xf32>
    %97 = vector.multi_reduction <add>, %96, %cst_27 [1] : vector<8x8xf32> to vector<8xf32>
    %98 = vector.shape_cast %97 : vector<8xf32> to vector<8x1xf32>
    %99 = tpu.reciprocal %98 {approx = true} : vector<8x1xf32> -> vector<8x1xf32>
    %100 = vector.broadcast %99 : vector<8x1xf32> to vector<8x8xf32>
    %101 = arith.mulf %96, %100 : vector<8x8xf32>
    %102 = arith.truncf %101 : vector<8x8xf32> to vector<8x8xbf16>
    %cst_28 = arith.constant dense<0.000000e+00> : vector<8x8xf32>
    %103 = tpu.matmul %102, %89, %cst_28 {dimension_numbers = #tpu.dot_dimension_numbers<[1], [0], [0], [1], [0, 0, 1, 1], [], []>} : vector<8x8xbf16>, vector<8x8xbf16>, vector<8x8xf32> -> vector<8x8xf32>
    %104 = arith.truncf %103 : vector<8x8xf32> to vector<8x8xbf16>
    %105 = vector.extract_strided_slice %3 {offsets = [24, 0], sizes = [8, 32], strides = [1, 1]} : vector<32x32xbf16> to vector<8x32xbf16>
    %cst_29 = arith.constant dense<0.000000e+00> : vector<8x32xf32>
    %106 = tpu.matmul %104, %105, %cst_29 {dimension_numbers = #tpu.dot_dimension_numbers<[1], [0], [0], [1], [0, 0, 1, 1], [], []>} : vector<8x8xbf16>, vector<8x32xbf16>, vector<8x32xf32> -> vector<8x32xf32>
    %107 = arith.addf %86, %106 : vector<8x32xf32>
    %108 = vector.shape_cast %22 : vector<32xf32> to vector<1x32xf32>
    %109 = vector.broadcast %108 : vector<1x32xf32> to vector<8x32xf32>
    %110 = arith.addf %107, %109 : vector<8x32xf32>
    %c0_30 = arith.constant 0 : index
    %c0_31 = arith.constant 0 : index
    %111 = vector.load %arg6[%c0_30, %c0_31] : memref<16x32xf32, #tpu.memory_space<vmem>>, vector<8x32xf32>
    tpu.vector_store %arg6[%c0_30, %c0_31], %110 {strides = array<i32>} : memref<16x32xf32, #tpu.memory_space<vmem>>, vector<8x32xf32>,
    %cst_32 = arith.constant 0.000000e+00 : f32
    %112 = vector.broadcast %cst_32 : f32 to vector<8x32xf32>
    %113 = vector.extract_strided_slice %11 {offsets = [8, 0], sizes = [8, 8], strides = [1, 1]} : vector<16x32xbf16> to vector<8x8xbf16>
    %114 = vector.extract_strided_slice %13 {offsets = [8, 0], sizes = [8, 8], strides = [1, 1]} : vector<16x32xbf16> to vector<8x8xbf16>
    %115 = vector.extract_strided_slice %15 {offsets = [8, 0], sizes = [8, 8], strides = [1, 1]} : vector<16x32xbf16> to vector<8x8xbf16>
    %cst_33 = arith.constant dense<0.000000e+00> : vector<8x8xf32>
    %116 = tpu.matmul %113, %114, %cst_33 {dimension_numbers = #tpu.dot_dimension_numbers<[1], [1], [0], [0], [0, 0, 1, 0], [], []>} : vector<8x8xbf16>, vector<8x8xbf16>, vector<8x8xf32> -> vector<8x8xf32>
    %117 = arith.addf %116, %20 : vector<8x8xf32>
    %cst_34 = arith.constant dense<0xFF800000> : vector<8xf32>
    %118 = vector.multi_reduction <maximumf>, %117, %cst_34 [1] : vector<8x8xf32> to vector<8xf32>
    %119 = vector.shape_cast %118 : vector<8xf32> to vector<8x1xf32>
    %120 = vector.broadcast %119 : vector<8x1xf32> to vector<8x8xf32>
    %121 = arith.subf %117, %120 : vector<8x8xf32>
    %122 = math.exp %121 : vector<8x8xf32>
    %cst_35 = arith.constant dense<0.000000e+00> : vector<8xf32>
    %123 = vector.multi_reduction <add>, %122, %cst_35 [1] : vector<8x8xf32> to vector<8xf32>
    %124 = vector.shape_cast %123 : vector<8xf32> to vector<8x1xf32>
    %125 = tpu.reciprocal %124 {approx = true} : vector<8x1xf32> -> vector<8x1xf32>
    %126 = vector.broadcast %125 : vector<8x1xf32> to vector<8x8xf32>
    %127 = arith.mulf %122, %126 : vector<8x8xf32>
    %128 = arith.truncf %127 : vector<8x8xf32> to vector<8x8xbf16>
    %cst_36 = arith.constant dense<0.000000e+00> : vector<8x8xf32>
    %129 = tpu.matmul %128, %115, %cst_36 {dimension_numbers = #tpu.dot_dimension_numbers<[1], [0], [0], [1], [0, 0, 1, 1], [], []>} : vector<8x8xbf16>, vector<8x8xbf16>, vector<8x8xf32> -> vector<8x8xf32>
    %130 = arith.truncf %129 : vector<8x8xf32> to vector<8x8xbf16>
    %131 = vector.extract_strided_slice %3 {offsets = [0, 0], sizes = [8, 32], strides = [1, 1]} : vector<32x32xbf16> to vector<8x32xbf16>
    %cst_37 = arith.constant dense<0.000000e+00> : vector<8x32xf32>
    %132 = tpu.matmul %130, %131, %cst_37 {dimension_numbers = #tpu.dot_dimension_numbers<[1], [0], [0], [1], [0, 0, 1, 1], [], []>} : vector<8x8xbf16>, vector<8x32xbf16>, vector<8x32xf32> -> vector<8x32xf32>
    %133 = arith.addf %112, %132 : vector<8x32xf32>
    %134 = vector.extract_strided_slice %11 {offsets = [8, 8], sizes = [8, 8], strides = [1, 1]} : vector<16x32xbf16> to vector<8x8xbf16>
    %135 = vector.extract_strided_slice %13 {offsets = [8, 8], sizes = [8, 8], strides = [1, 1]} : vector<16x32xbf16> to vector<8x8xbf16>
    %136 = vector.extract_strided_slice %15 {offsets = [8, 8], sizes = [8, 8], strides = [1, 1]} : vector<16x32xbf16> to vector<8x8xbf16>
    %cst_38 = arith.constant dense<0.000000e+00> : vector<8x8xf32>
    %137 = tpu.matmul %134, %135, %cst_38 {dimension_numbers = #tpu.dot_dimension_numbers<[1], [1], [0], [0], [0, 0, 1, 0], [], []>} : vector<8x8xbf16>, vector<8x8xbf16>, vector<8x8xf32> -> vector<8x8xf32>
    %138 = arith.addf %137, %20 : vector<8x8xf32>
    %cst_39 = arith.constant dense<0xFF800000> : vector<8xf32>
    %139 = vector.multi_reduction <maximumf>, %138, %cst_39 [1] : vector<8x8xf32> to vector<8xf32>
    %140 = vector.shape_cast %139 : vector<8xf32> to vector<8x1xf32>
    %141 = vector.broadcast %140 : vector<8x1xf32> to vector<8x8xf32>
    %142 = arith.subf %138, %141 : vector<8x8xf32>
    %143 = math.exp %142 : vector<8x8xf32>
    %cst_40 = arith.constant dense<0.000000e+00> : vector<8xf32>
    %144 = vector.multi_reduction <add>, %143, %cst_40 [1] : vector<8x8xf32> to vector<8xf32>
    %145 = vector.shape_cast %144 : vector<8xf32> to vector<8x1xf32>
    %146 = tpu.reciprocal %145 {approx = true} : vector<8x1xf32> -> vector<8x1xf32>
    %147 = vector.broadcast %146 : vector<8x1xf32> to vector<8x8xf32>
    %148 = arith.mulf %143, %147 : vector<8x8xf32>
    %149 = arith.truncf %148 : vector<8x8xf32> to vector<8x8xbf16>
    %cst_41 = arith.constant dense<0.000000e+00> : vector<8x8xf32>
    %150 = tpu.matmul %149, %136, %cst_41 {dimension_numbers = #tpu.dot_dimension_numbers<[1], [0], [0], [1], [0, 0, 1, 1], [], []>} : vector<8x8xbf16>, vector<8x8xbf16>, vector<8x8xf32> -> vector<8x8xf32>
    %151 = arith.truncf %150 : vector<8x8xf32> to vector<8x8xbf16>
    %152 = vector.extract_strided_slice %3 {offsets = [8, 0], sizes = [8, 32], strides = [1, 1]} : vector<32x32xbf16> to vector<8x32xbf16>
    %cst_42 = arith.constant dense<0.000000e+00> : vector<8x32xf32>
    %153 = tpu.matmul %151, %152, %cst_42 {dimension_numbers = #tpu.dot_dimension_numbers<[1], [0], [0], [1], [0, 0, 1, 1], [], []>} : vector<8x8xbf16>, vector<8x32xbf16>, vector<8x32xf32> -> vector<8x32xf32>
    %154 = arith.addf %133, %153 : vector<8x32xf32>
    %155 = vector.extract_strided_slice %11 {offsets = [8, 16], sizes = [8, 8], strides = [1, 1]} : vector<16x32xbf16> to vector<8x8xbf16>
    %156 = vector.extract_strided_slice %13 {offsets = [8, 16], sizes = [8, 8], strides = [1, 1]} : vector<16x32xbf16> to vector<8x8xbf16>
    %157 = vector.extract_strided_slice %15 {offsets = [8, 16], sizes = [8, 8], strides = [1, 1]} : vector<16x32xbf16> to vector<8x8xbf16>
    %cst_43 = arith.constant dense<0.000000e+00> : vector<8x8xf32>
    %158 = tpu.matmul %155, %156, %cst_43 {dimension_numbers = #tpu.dot_dimension_numbers<[1], [1], [0], [0], [0, 0, 1, 0], [], []>} : vector<8x8xbf16>, vector<8x8xbf16>, vector<8x8xf32> -> vector<8x8xf32>
    %159 = arith.addf %158, %20 : vector<8x8xf32>
    %cst_44 = arith.constant dense<0xFF800000> : vector<8xf32>
    %160 = vector.multi_reduction <maximumf>, %159, %cst_44 [1] : vector<8x8xf32> to vector<8xf32>
    %161 = vector.shape_cast %160 : vector<8xf32> to vector<8x1xf32>
    %162 = vector.broadcast %161 : vector<8x1xf32> to vector<8x8xf32>
    %163 = arith.subf %159, %162 : vector<8x8xf32>
    %164 = math.exp %163 : vector<8x8xf32>
    %cst_45 = arith.constant dense<0.000000e+00> : vector<8xf32>
    %165 = vector.multi_reduction <add>, %164, %cst_45 [1] : vector<8x8xf32> to vector<8xf32>
    %166 = vector.shape_cast %165 : vector<8xf32> to vector<8x1xf32>
    %167 = tpu.reciprocal %166 {approx = true} : vector<8x1xf32> -> vector<8x1xf32>
    %168 = vector.broadcast %167 : vector<8x1xf32> to vector<8x8xf32>
    %169 = arith.mulf %164, %168 : vector<8x8xf32>
    %170 = arith.truncf %169 : vector<8x8xf32> to vector<8x8xbf16>
    %cst_46 = arith.constant dense<0.000000e+00> : vector<8x8xf32>
    %171 = tpu.matmul %170, %157, %cst_46 {dimension_numbers = #tpu.dot_dimension_numbers<[1], [0], [0], [1], [0, 0, 1, 1], [], []>} : vector<8x8xbf16>, vector<8x8xbf16>, vector<8x8xf32> -> vector<8x8xf32>
    %172 = arith.truncf %171 : vector<8x8xf32> to vector<8x8xbf16>
    %173 = vector.extract_strided_slice %3 {offsets = [16, 0], sizes = [8, 32], strides = [1, 1]} : vector<32x32xbf16> to vector<8x32xbf16>
    %cst_47 = arith.constant dense<0.000000e+00> : vector<8x32xf32>
    %174 = tpu.matmul %172, %173, %cst_47 {dimension_numbers = #tpu.dot_dimension_numbers<[1], [0], [0], [1], [0, 0, 1, 1], [], []>} : vector<8x8xbf16>, vector<8x32xbf16>, vector<8x32xf32> -> vector<8x32xf32>
    %175 = arith.addf %154, %174 : vector<8x32xf32>
    %176 = vector.extract_strided_slice %11 {offsets = [8, 24], sizes = [8, 8], strides = [1, 1]} : vector<16x32xbf16> to vector<8x8xbf16>
    %177 = vector.extract_strided_slice %13 {offsets = [8, 24], sizes = [8, 8], strides = [1, 1]} : vector<16x32xbf16> to vector<8x8xbf16>
    %178 = vector.extract_strided_slice %15 {offsets = [8, 24], sizes = [8, 8], strides = [1, 1]} : vector<16x32xbf16> to vector<8x8xbf16>
    %cst_48 = arith.constant dense<0.000000e+00> : vector<8x8xf32>
    %179 = tpu.matmul %176, %177, %cst_48 {dimension_numbers = #tpu.dot_dimension_numbers<[1], [1], [0], [0], [0, 0, 1, 0], [], []>} : vector<8x8xbf16>, vector<8x8xbf16>, vector<8x8xf32> -> vector<8x8xf32>
    %180 = arith.addf %179, %20 : vector<8x8xf32>
    %cst_49 = arith.constant dense<0xFF800000> : vector<8xf32>
    %181 = vector.multi_reduction <maximumf>, %180, %cst_49 [1] : vector<8x8xf32> to vector<8xf32>
    %182 = vector.shape_cast %181 : vector<8xf32> to vector<8x1xf32>
    %183 = vector.broadcast %182 : vector<8x1xf32> to vector<8x8xf32>
    %184 = arith.subf %180, %183 : vector<8x8xf32>
    %185 = math.exp %184 : vector<8x8xf32>
    %cst_50 = arith.constant dense<0.000000e+00> : vector<8xf32>
    %186 = vector.multi_reduction <add>, %185, %cst_50 [1] : vector<8x8xf32> to vector<8xf32>
    %187 = vector.shape_cast %186 : vector<8xf32> to vector<8x1xf32>
    %188 = tpu.reciprocal %187 {approx = true} : vector<8x1xf32> -> vector<8x1xf32>
    %189 = vector.broadcast %188 : vector<8x1xf32> to vector<8x8xf32>
    %190 = arith.mulf %185, %189 : vector<8x8xf32>
    %191 = arith.truncf %190 : vector<8x8xf32> to vector<8x8xbf16>
    %cst_51 = arith.constant dense<0.000000e+00> : vector<8x8xf32>
    %192 = tpu.matmul %191, %178, %cst_51 {dimension_numbers = #tpu.dot_dimension_numbers<[1], [0], [0], [1], [0, 0, 1, 1], [], []>} : vector<8x8xbf16>, vector<8x8xbf16>, vector<8x8xf32> -> vector<8x8xf32>
    %193 = arith.truncf %192 : vector<8x8xf32> to vector<8x8xbf16>
    %194 = vector.extract_strided_slice %3 {offsets = [24, 0], sizes = [8, 32], strides = [1, 1]} : vector<32x32xbf16> to vector<8x32xbf16>
    %cst_52 = arith.constant dense<0.000000e+00> : vector<8x32xf32>
    %195 = tpu.matmul %193, %194, %cst_52 {dimension_numbers = #tpu.dot_dimension_numbers<[1], [0], [0], [1], [0, 0, 1, 1], [], []>} : vector<8x8xbf16>, vector<8x32xbf16>, vector<8x32xf32> -> vector<8x32xf32>
    %196 = arith.addf %175, %195 : vector<8x32xf32>
    %197 = vector.shape_cast %22 : vector<32xf32> to vector<1x32xf32>
    %198 = vector.broadcast %197 : vector<1x32xf32> to vector<8x32xf32>
    %199 = arith.addf %196, %198 : vector<8x32xf32>
    %c8 = arith.constant 8 : index
    %c0_53 = arith.constant 0 : index
    %200 = vector.load %arg6[%c8, %c0_53] : memref<16x32xf32, #tpu.memory_space<vmem>>, vector<8x32xf32>
    tpu.vector_store %arg6[%c8, %c0_53], %199 {strides = array<i32>} : memref<16x32xf32, #tpu.memory_space<vmem>>, vector<8x32xf32>,
    return
  }
  func.func @transform_0(%arg0: i32) -> (i32, i32) {
    %c0_i32 = arith.constant 0 : i32
    %c0_i32_0 = arith.constant 0 : i32
    return %arg0, %c0_i32 : i32, i32
  }
  func.func @transform_1(%arg0: i32) -> (i32, i32) {
    %c0_i32 = arith.constant 0 : i32
    %c0_i32_0 = arith.constant 0 : i32
    %c0_i32_1 = arith.constant 0 : i32
    return %c0_i32, %c0_i32_0 : i32, i32
  }
  func.func @transform_2(%arg0: i32) -> (i32, i32) {
    %c0_i32 = arith.constant 0 : i32
    %c0_i32_0 = arith.constant 0 : i32
    %c0_i32_1 = arith.constant 0 : i32
    return %c0_i32, %c0_i32_0 : i32, i32
  }
  func.func @transform_3(%arg0: i32) -> (i32, i32) {
    %c0_i32 = arith.constant 0 : i32
    %c0_i32_0 = arith.constant 0 : i32
    %c0_i32_1 = arith.constant 0 : i32
    return %c0_i32, %c0_i32_0 : i32, i32
  }
  func.func @transform_4(%arg0: i32) -> (i32, i32) {
    %c0_i32 = arith.constant 0 : i32
    %c0_i32_0 = arith.constant 0 : i32
    %c0_i32_1 = arith.constant 0 : i32
    return %c0_i32, %c0_i32_0 : i32, i32
  }
  func.func @transform_5(%arg0: i32) -> (i32, i32) {
    %c0_i32 = arith.constant 0 : i32
    %c0_i32_0 = arith.constant 0 : i32
    return %arg0, %c0_i32 : i32, i32
  }
}

</mosaic_0001>

<llo_original>
// kernel: tpu_custom_call.1
$region0: #{tpu_custom_call.1}
  #allocation0 [shape = 'u32[]', space=smem, size = 0x4, offset = 0x4, fixed_abs, tag = 'smem constant byte address 0x4 - core index']
  #allocation1 [shape = 'u32[144,128]{1,0:T(1,128)}', space=vmem, size = 0x12000, scoped, tag = 'internal scratch']
  %s0 = inlined_call_operand.hbm [shape: f32[16,32], index: 0, kind: input, shape index: {}]
  %s1 = inlined_call_operand.hbm [shape: bf16[32,96], index: 1, kind: input, shape index: {}]
  %s2 = inlined_call_operand.vmem [shape: f32[1,96], index: 2, kind: input, shape index: {}]
  %s3 = inlined_call_operand.hbm [shape: bf16[32,32], index: 3, kind: input, shape index: {}]
  %s4 = inlined_call_operand.vmem [shape: f32[1,32], index: 4, kind: input, shape index: {}]
  %s5 = inlined_call_operand.hbm [shape: f32[16,32], index: 5, kind: output, shape index: {}]
  %s6 = sld [smem:[#allocation0]]
  $region42: #{tpu_custom_call.1} parent=0
    _
  %s8 = ssub.s32 1, %s6
  %s9 = scalar_select 0, %s8, %s6
  $region1: #{tpu_custom_call.1} parent=0
    #allocation2 [shape = 'u8[8192]{0}', space=vmem, size = 0x2000, scoped, tag = 'input window, operand 0, single buffered']
    #allocation3 [shape = 's32[1]{0}', space=sflag, size = 0x4, scoped, tag = 'scoped memory for tpu_custom_call.1']
    #allocation4 [shape = 's32[1]{0}', space=sflag, size = 0x4, scoped, tag = 'scoped memory for tpu_custom_call.1']
    #allocation5 [shape = 'u8[8192]{0}', space=vmem, size = 0x2000, scoped, tag = 'input window, operand 1, single buffered']
    #allocation6 [shape = 's32[1]{0}', space=sflag, size = 0x4, scoped, tag = 'scoped memory for tpu_custom_call.1']
    #allocation7 [shape = 'u8[8192]{0}', space=vmem, size = 0x2000, scoped, tag = 'input window, operand 3, single buffered']
    #allocation8 [shape = 'u8[8192]{0}', space=vmem, size = 0x2000, scoped, tag = 'output window, operand 0, single buffered']
    %10 = vsyncpa [#allocation3], 0
    %11 = vsyncpa [#allocation6], 0
    %12 = vsyncpa [#allocation4], 0
    // Predicated region
    $region2: #{tpu_custom_call.1} parent=1 // pred_check
      _
    $region3: #{tpu_custom_call.1} parent=1 // pred_check_branch
      %14 = sbr.rel (0) target = $region5
    $region4: #{tpu_custom_call.1} parent=1 // pred_region
      %s16 = ssub.s32 256, 256
      %17 = vsyncadd [#allocation3], %s16
      %s18 = sshll.u32 [#allocation2], 4
      %s19 = int_to_ptr.vmem [resolvable:$true] %s18
      %24 = dma.hbm_to_vmem [thread:$0]  %s0, 256, %s19, [#allocation3], 128, 128, 8
    $region5: #{tpu_custom_call.1} parent=1 // pred_fallthru
      _
    // Predicated region
    $region6: #{tpu_custom_call.1} parent=1 // pred_check
      _
    $region7: #{tpu_custom_call.1} parent=1 // pred_check_branch
      %26 = sbr.rel (0) target = $region9
    $region8: #{tpu_custom_call.1} parent=1 // pred_region
      %s28 = ssub.s32 256, 256
      %29 = vsyncadd [#allocation6], %s28
      %s30 = sshll.u32 [#allocation5], 4
      %s31 = int_to_ptr.vmem [resolvable:$true] %s30
      %36 = dma.hbm_to_vmem [thread:$0]  %s1, 256, %s31, [#allocation6], 64, 64, 4
    $region9: #{tpu_custom_call.1} parent=1 // pred_fallthru
      _
    // Predicated region
    $region10: #{tpu_custom_call.1} parent=1 // pred_check
      _
    $region11: #{tpu_custom_call.1} parent=1 // pred_check_branch
      %38 = sbr.rel (0) target = $region13
    $region12: #{tpu_custom_call.1} parent=1 // pred_region
      _
    $region13: #{tpu_custom_call.1} parent=1 // pred_fallthru
      _
    // Predicated region
    $region14: #{tpu_custom_call.1} parent=1 // pred_check
      _
    $region15: #{tpu_custom_call.1} parent=1 // pred_check_branch
      %40 = sbr.rel (0) target = $region17
    $region16: #{tpu_custom_call.1} parent=1 // pred_region
      %s42 = ssub.s32 256, 256
      %43 = vsyncadd [#allocation6], %s42
      %s44 = sshll.u32 [#allocation7], 4
      %s45 = int_to_ptr.vmem [resolvable:$true] %s44
      %50 = dma.hbm_to_vmem [thread:$0]  %s3, 256, %s45, [#allocation6], 64, 64, 4
    $region17: #{tpu_custom_call.1} parent=1 // pred_fallthru
      _
    // Predicated region
    $region18: #{tpu_custom_call.1} parent=1 // pred_check
      _
    $region19: #{tpu_custom_call.1} parent=1 // pred_check_branch
      %52 = sbr.rel (0) target = $region21
    $region20: #{tpu_custom_call.1} parent=1 // pred_region
      _
    $region21: #{tpu_custom_call.1} parent=1 // pred_fallthru
      _
    // Predicated region
    $region22: #{tpu_custom_call.1} parent=1 // pred_check
      _
    $region23: #{tpu_custom_call.1} parent=1 // pred_check_branch
      %54 = sbr.rel (0) target = $region25
    $region24: #{tpu_custom_call.1} parent=1 // pred_region
      %55 = dma.done [#allocation3], 256
    $region25: #{tpu_custom_call.1} parent=1 // pred_fallthru
      _
    // Predicated region
    $region26: #{tpu_custom_call.1} parent=1 // pred_check
      _
    $region27: #{tpu_custom_call.1} parent=1 // pred_check_branch
      %57 = sbr.rel (0) target = $region29
    $region28: #{tpu_custom_call.1} parent=1 // pred_region
      %58 = dma.done [#allocation6], 256
    $region29: #{tpu_custom_call.1} parent=1 // pred_fallthru
      _
    // Predicated region
    $region30: #{tpu_custom_call.1} parent=1 // pred_check
      _
    $region31: #{tpu_custom_call.1} parent=1 // pred_check_branch
      %60 = sbr.rel (0) target = $region33
    $region32: #{tpu_custom_call.1} parent=1 // pred_region
      %61 = dma.done [#allocation6], 256
    $region33: #{tpu_custom_call.1} parent=1 // pred_fallthru
      _
    %v63 = vld [vmem:[#allocation2] sm:$0xff]
    %v64 = vld [vmem:[#allocation2 + $0x8] sm:$0xff]
    %v65 = vpack.c.bf16 %v64, %v63
    %v66 = vld [vmem:[#allocation5] sm:$0xf]
    %v67 = vld [vmem:[#allocation5 + $0x4] sm:$0xf]
    %v68 = vld [vmem:[#allocation5 + $0x8] sm:$0xf]
    %v69 = vld [vmem:[#allocation5 + $0xc] sm:$0xf]
    %v70 = vld [vmem:[#allocation7] sm:$0xf]
    %v71 = vld [vmem:[#allocation7 + $0x4] sm:$0xf]
    %v72 = vld [vmem:[#allocation7 + $0x8] sm:$0xf]
    %v73 = vld [vmem:[#allocation7 + $0xc] sm:$0xf]
    %v74 = vld [vmem:[%s2] sm:$0x1]
    %v76 = vlaneseq
    %v77 = vshrl.u32 %v76, 7
    %v78 = vsub.s32 0, %v77
    %v79 = vrot.slane %v74, %v78
    %v85 = vunpack.c.l.b16 %v66
    %v86 = vunpack.c.l.b16 %v67
    %v87 = vunpack.c.l.b16 %v68
    %v88 = vunpack.c.l.b16 %v69
    %v89 = vpack.c.b16 %v86, %v85
    %v90 = vpack.c.b16 %v88, %v87
    %vm93 = vcmask 261120
    %v95 = vsel %vm93, %v65, 0
    %97 = vmatprep.subr.bf16.mxu0 0
    %98 = vmatpush1.bf16.msra.mxu0 %v89
    %99 = vmatprep.subr.bf16.mxu0 0
    %100 = vmatpush1.bf16.msra.mxu0 %v90
    %101 = vmatprep.subr.bf16.mxu0 0
    %102 = vmatpush1.bf16.msra.mxu0 0
    %103 = vmatprep.subr.bf16.mxu0 0
    %104 = vmatpush1.bf16.msra.mxu0 0
    %105 = vmatprep.subr.bf16.mxu0 0
    %106 = vmatpush1.bf16.msra.mxu0 0
    %107 = vmatprep.subr.bf16.mxu0 0
    %108 = vmatpush1.bf16.msra.mxu0 0
    %109 = vmatprep.subr.bf16.mxu0 0
    %110 = vmatpush1.bf16.msra.mxu0 0
    %111 = vmatprep.subr.bf16.mxu0 0
    %112 = vmatpush1.bf16.msra.mxu0 0
    %113 = vmatprep.subr.bf16.mxu0 0
    %114 = vmatpush1.bf16.msra.mxu0 0
    %115 = vmatprep.subr.bf16.mxu0 0
    %116 = vmatpush1.bf16.msra.mxu0 0
    %117 = vmatprep.subr.bf16.mxu0 0
    %118 = vmatpush1.bf16.msra.mxu0 0
    %119 = vmatprep.subr.bf16.mxu0 0
    %120 = vmatpush1.bf16.msra.mxu0 0
    %121 = vmatprep.subr.bf16.mxu0 0
    %122 = vmatpush1.bf16.msra.mxu0 0
    %123 = vmatprep.subr.bf16.mxu0 0
    %124 = vmatpush1.bf16.msra.mxu0 0
    %125 = vmatprep.subr.bf16.mxu0 0
    %126 = vmatpush1.bf16.msra.mxu0 0
    %127 = vmatprep.subr.bf16.mxu0 0
    %128 = vmatpush1.bf16.msra.mxu0 0
    %129 = vmatprep.mubr.bf16.mxu0 0
    %130 = vmatmul.mubr.bf16.gmra.mrb[0].mxu0 %v95
    %v131 = vpop.f32.mrb[0].mxu0
    %v132 = vadd.f32 %v79, %v131
    %v133 = vpop.f32.mrb[0].mxu0
    %v134 = vpop.f32.mrb[0].mxu0
    %v135 = vadd.f32 %v79, %v134
    %v136 = vpop.f32.mrb[0].mxu0
    %137 = vdwg.mxu0
    %v138 = vpack.c.bf16 %v135, %v132
    %v139 = vlaneseq
    %v140 = vshrl.u32 %v139, 7
    %v141 = vlaneseq
    %v142 = vand.u32 %v141, 127
    %vm143 = vcmp.ge.s32.totalorder %v140, %v142
    %v144 = vsel %vm143, 1, 0
    %v145 = vcvt.s32.f32 %v144
    %v146 = vld [vmem:[%s4] sm:$0x1]
    %148 = vrot.lane.b32.xlu0 %v138, 96
    %v149 = vpop.permute.xlu0 %148
    %vm150 = vcmask 64512
    %v152 = vsel %vm150, %v138, 0
    %v155 = vsel %vm150, %v149, 0
    %157 = vmatprep.subr.bf16.mxu0 0
    %158 = vmatpush1.bf16.xpose.msra.mxu0 %v155
    %159 = vmatprep.subr.bf16.mxu0 0
    %160 = vmatpush1.bf16.xpose.msra.mxu0 0
    %161 = vmatprep.subr.bf16.mxu0 0
    %162 = vmatpush1.bf16.xpose.msra.mxu0 0
    %163 = vmatprep.subr.bf16.mxu0 0
    %164 = vmatpush1.bf16.xpose.msra.mxu0 0
    %165 = vmatprep.subr.bf16.mxu0 0
    %166 = vmatpush1.bf16.xpose.msra.mxu0 0
    %167 = vmatprep.subr.bf16.mxu0 0
    %168 = vmatpush1.bf16.xpose.msra.mxu0 0
    %169 = vmatprep.subr.bf16.mxu0 0
    %170 = vmatpush1.bf16.xpose.msra.mxu0 0
    %171 = vmatprep.subr.bf16.mxu0 0
    %172 = vmatpush1.bf16.xpose.msra.mxu0 0
    %173 = vmatprep.subr.bf16.mxu0 0
    %174 = vmatpush1.bf16.xpose.msra.mxu0 0
    %175 = vmatprep.subr.bf16.mxu0 0
    %176 = vmatpush1.bf16.xpose.msra.mxu0 0
    %177 = vmatprep.subr.bf16.mxu0 0
    %178 = vmatpush1.bf16.xpose.msra.mxu0 0
    %179 = vmatprep.subr.bf16.mxu0 0
    %180 = vmatpush1.bf16.xpose.msra.mxu0 0
    %181 = vmatprep.subr.bf16.mxu0 0
    %182 = vmatpush1.bf16.xpose.msra.mxu0 0
    %183 = vmatprep.subr.bf16.mxu0 0
    %184 = vmatpush1.bf16.xpose.msra.mxu0 0
    %185 = vmatprep.subr.bf16.mxu0 0
    %186 = vmatpush1.bf16.xpose.msra.mxu0 0
    %187 = vmatprep.subr.bf16.mxu0 0
    %188 = vmatpush1.bf16.xpose.msra.mxu0 0
    %189 = vmatprep.mubr.bf16.mxu0 0
    %190 = vmatmul.mubr.bf16.gmra.mrb[0].mxu0 %v152
    %v191 = vpop.f32.mrb[0].mxu0
    %v192 = vadd.f32 %v145, %v191
    %v193 = vpop.f32.mrb[0].mxu0
    %v194 = vpop.f32.mrb[0].mxu0
    %v195 = vpop.f32.mrb[0].mxu0
    %196 = vdwg.mxu0
    %v197 = vsel %vm150, %v192, -inf
    %198 = vmax.xlane.f32.xlu0 %v197
    %v199 = vpop.xlane.xlu0 %198
    %v200 = vsub.f32 %v192, %v199
    %v201 = vmul.f32 %v200, 1.442695
    %v202 = vpow.pop %v201
    %v203 = vsel %vm150, %v202, 0.0
    %204 = vadd.xlane.f32.xlu0 %v203
    %v205 = vpop.xlane.xlu0 %204
    %v206 = vrcp.pop %v205
    %v207 = vmul.f32 %v202, %v206
    %v208 = vpack.c.bf16 %v207, %v207
    %209 = vrot.lane.b32.xlu0 %v138, 64
    %v210 = vpop.permute.xlu0 %209
    %v212 = vsel %vm150, %v208, 0
    %vm214 = vcmask 1043456
    %v216 = vsel %vm214, %v210, 0
    %218 = vmatprep.subr.bf16.mxu0 0
    %219 = vmatpush1.bf16.msra.mxu0 %v216
    %220 = vmatprep.subr.bf16.mxu0 0
    %221 = vmatpush1.bf16.msra.mxu0 0
    %222 = vmatprep.subr.bf16.mxu0 0
    %223 = vmatpush1.bf16.msra.mxu0 0
    %224 = vmatprep.subr.bf16.mxu0 0
    %225 = vmatpush1.bf16.msra.mxu0 0
    %226 = vmatprep.subr.bf16.mxu0 0
    %227 = vmatpush1.bf16.msra.mxu0 0
    %228 = vmatprep.subr.bf16.mxu0 0
    %229 = vmatpush1.bf16.msra.mxu0 0
    %230 = vmatprep.subr.bf16.mxu0 0
    %231 = vmatpush1.bf16.msra.mxu0 0
    %232 = vmatprep.subr.bf16.mxu0 0
    %233 = vmatpush1.bf16.msra.mxu0 0
    %234 = vmatprep.subr.bf16.mxu0 0
    %235 = vmatpush1.bf16.msra.mxu0 0
    %236 = vmatprep.subr.bf16.mxu0 0
    %237 = vmatpush1.bf16.msra.mxu0 0
    %238 = vmatprep.subr.bf16.mxu0 0
    %239 = vmatpush1.bf16.msra.mxu0 0
    %240 = vmatprep.subr.bf16.mxu0 0
    %241 = vmatpush1.bf16.msra.mxu0 0
    %242 = vmatprep.subr.bf16.mxu0 0
    %243 = vmatpush1.bf16.msra.mxu0 0
    %244 = vmatprep.subr.bf16.mxu0 0
    %245 = vmatpush1.bf16.msra.mxu0 0
    %246 = vmatprep.subr.bf16.mxu0 0
    %247 = vmatpush1.bf16.msra.mxu0 0
    %248 = vmatprep.subr.bf16.mxu0 0
    %249 = vmatpush1.bf16.msra.mxu0 0
    %250 = vmatprep.mubr.bf16.mxu0 0
    %251 = vmatmul.mubr.bf16.gmra.mrb[0].mxu0 %v212
    %v252 = vpop.f32.mrb[0].mxu0
    %v253 = vadd.f32 0.0, %v252
    %v254 = vpop.f32.mrb[0].mxu0
    %v255 = vpop.f32.mrb[0].mxu0
    %v256 = vpop.f32.mrb[0].mxu0
    %257 = vdwg.mxu0
    %v258 = vpack.c.bf16 %v253, %v253
    %259 = vrot.lane.b32.xlu0 %v138, 120
    %v260 = vpop.permute.xlu0 %259
    %261 = vrot.lane.b32.xlu0 %v138, 88
    %v262 = vpop.permute.xlu0 %261
    %v264 = vsel %vm150, %v260, 0
    %v267 = vsel %vm150, %v262, 0
    %269 = vmatprep.subr.bf16.mxu0 0
    %270 = vmatpush1.bf16.xpose.msra.mxu0 %v267
    %271 = vmatprep.subr.bf16.mxu0 0
    %272 = vmatpush1.bf16.xpose.msra.mxu0 0
    %273 = vmatprep.subr.bf16.mxu0 0
    %274 = vmatpush1.bf16.xpose.msra.mxu0 0
    %275 = vmatprep.subr.bf16.mxu0 0
    %276 = vmatpush1.bf16.xpose.msra.mxu0 0
    %277 = vmatprep.subr.bf16.mxu0 0
    %278 = vmatpush1.bf16.xpose.msra.mxu0 0
    %279 = vmatprep.subr.bf16.mxu0 0
    %280 = vmatpush1.bf16.xpose.msra.mxu0 0
    %281 = vmatprep.subr.bf16.mxu0 0
    %282 = vmatpush1.bf16.xpose.msra.mxu0 0
    %283 = vmatprep.subr.bf16.mxu0 0
    %284 = vmatpush1.bf16.xpose.msra.mxu0 0
    %285 = vmatprep.subr.bf16.mxu0 0
    %286 = vmatpush1.bf16.xpose.msra.mxu0 0
    %287 = vmatprep.subr.bf16.mxu0 0
    %288 = vmatpush1.bf16.xpose.msra.mxu0 0
    %289 = vmatprep.subr.bf16.mxu0 0
    %290 = vmatpush1.bf16.xpose.msra.mxu0 0
    %291 = vmatprep.subr.bf16.mxu0 0
    %292 = vmatpush1.bf16.xpose.msra.mxu0 0
    %293 = vmatprep.subr.bf16.mxu0 0
    %294 = vmatpush1.bf16.xpose.msra.mxu0 0
    %295 = vmatprep.subr.bf16.mxu0 0
    %296 = vmatpush1.bf16.xpose.msra.mxu0 0
    %297 = vmatprep.subr.bf16.mxu0 0
    %298 = vmatpush1.bf16.xpose.msra.mxu0 0
    %299 = vmatprep.subr.bf16.mxu0 0
    %300 = vmatpush1.bf16.xpose.msra.mxu0 0
    %301 = vmatprep.mubr.bf16.mxu0 0
    %302 = vmatmul.mubr.bf16.gmra.mrb[0].mxu0 %v264
    %v303 = vpop.f32.mrb[0].mxu0
    %v304 = vadd.f32 %v145, %v303
    %v305 = vpop.f32.mrb[0].mxu0
    %v306 = vpop.f32.mrb[0].mxu0
    %v307 = vpop.f32.mrb[0].mxu0
    %308 = vdwg.mxu0
    %v309 = vsel %vm150, %v304, -inf
    %310 = vmax.xlane.f32.xlu0 %v309
    %v311 = vpop.xlane.xlu0 %310
    %v312 = vsub.f32 %v304, %v311
    %v313 = vmul.f32 %v312, 1.442695
    %v314 = vpow.pop %v313
    %v315 = vsel %vm150, %v314, 0.0
    %316 = vadd.xlane.f32.xlu0 %v315
    %v317 = vpop.xlane.xlu0 %316
    %v318 = vrcp.pop %v317
    %v319 = vmul.f32 %v314, %v318
    %v320 = vpack.c.bf16 %v319, %v319
    %321 = vrot.lane.b32.xlu0 %v138, 56
    %v322 = vpop.permute.xlu0 %321
    %v324 = vsel %vm150, %v320, 0
    %v327 = vsel %vm214, %v322, 0
    %329 = vmatprep.subr.bf16.mxu0 0
    %330 = vmatpush1.bf16.msra.mxu0 %v327
    %331 = vmatprep.subr.bf16.mxu0 0
    %332 = vmatpush1.bf16.msra.mxu0 0
    %333 = vmatprep.subr.bf16.mxu0 0
    %334 = vmatpush1.bf16.msra.mxu0 0
    %335 = vmatprep.subr.bf16.mxu0 0
    %336 = vmatpush1.bf16.msra.mxu0 0
    %337 = vmatprep.subr.bf16.mxu0 0
    %338 = vmatpush1.bf16.msra.mxu0 0
    %339 = vmatprep.subr.bf16.mxu0 0
    %340 = vmatpush1.bf16.msra.mxu0 0
    %341 = vmatprep.subr.bf16.mxu0 0
    %342 = vmatpush1.bf16.msra.mxu0 0
    %343 = vmatprep.subr.bf16.mxu0 0
    %344 = vmatpush1.bf16.msra.mxu0 0
    %345 = vmatprep.subr.bf16.mxu0 0
    %346 = vmatpush1.bf16.msra.mxu0 0
    %347 = vmatprep.subr.bf16.mxu0 0
    %348 = vmatpush1.bf16.msra.mxu0 0
    %349 = vmatprep.subr.bf16.mxu0 0
    %350 = vmatpush1.bf16.msra.mxu0 0
    %351 = vmatprep.subr.bf16.mxu0 0
    %352 = vmatpush1.bf16.msra.mxu0 0
    %353 = vmatprep.subr.bf16.mxu0 0
    %354 = vmatpush1.bf16.msra.mxu0 0
    %355 = vmatprep.subr.bf16.mxu0 0
    %356 = vmatpush1.bf16.msra.mxu0 0
    %357 = vmatprep.subr.bf16.mxu0 0
    %358 = vmatpush1.bf16.msra.mxu0 0
    %359 = vmatprep.subr.bf16.mxu0 0
    %360 = vmatpush1.bf16.msra.mxu0 0
    %361 = vmatprep.mubr.bf16.mxu0 0
    %362 = vmatmul.mubr.bf16.gmra.mrb[0].mxu0 %v324
    %v363 = vpop.f32.mrb[0].mxu0
    %v364 = vadd.f32 0.0, %v363
    %v365 = vpop.f32.mrb[0].mxu0
    %v366 = vpop.f32.mrb[0].mxu0
    %v367 = vpop.f32.mrb[0].mxu0
    %368 = vdwg.mxu0
    %v369 = vpack.c.bf16 %v364, %v364
    %v371 = vsel %vm150, %v369, 0
    %v374 = vsel %vm214, %v71, 0
    %376 = vmatprep.subr.bf16.mxu0 0
    %377 = vmatpush1.bf16.msra.mxu0 %v374
    %378 = vmatprep.subr.bf16.mxu0 0
    %379 = vmatpush1.bf16.msra.mxu0 0
    %380 = vmatprep.subr.bf16.mxu0 0
    %381 = vmatpush1.bf16.msra.mxu0 0
    %382 = vmatprep.subr.bf16.mxu0 0
    %383 = vmatpush1.bf16.msra.mxu0 0
    %384 = vmatprep.subr.bf16.mxu0 0
    %385 = vmatpush1.bf16.msra.mxu0 0
    %386 = vmatprep.subr.bf16.mxu0 0
    %387 = vmatpush1.bf16.msra.mxu0 0
    %388 = vmatprep.subr.bf16.mxu0 0
    %389 = vmatpush1.bf16.msra.mxu0 0
    %390 = vmatprep.subr.bf16.mxu0 0
    %391 = vmatpush1.bf16.msra.mxu0 0
    %392 = vmatprep.subr.bf16.mxu0 0
    %393 = vmatpush1.bf16.msra.mxu0 0
    %394 = vmatprep.subr.bf16.mxu0 0
    %395 = vmatpush1.bf16.msra.mxu0 0
    %396 = vmatprep.subr.bf16.mxu0 0
    %397 = vmatpush1.bf16.msra.mxu0 0
    %398 = vmatprep.subr.bf16.mxu0 0
    %399 = vmatpush1.bf16.msra.mxu0 0
    %400 = vmatprep.subr.bf16.mxu0 0
    %401 = vmatpush1.bf16.msra.mxu0 0
    %402 = vmatprep.subr.bf16.mxu0 0
    %403 = vmatpush1.bf16.msra.mxu0 0
    %404 = vmatprep.subr.bf16.mxu0 0
    %405 = vmatpush1.bf16.msra.mxu0 0
    %406 = vmatprep.subr.bf16.mxu0 0
    %407 = vmatpush1.bf16.msra.mxu0 0
    %408 = vmatprep.mubr.bf16.mxu0 0
    %409 = vmatmul.mubr.bf16.gmra.mrb[0].mxu0 %v371
    %v410 = vpop.f32.mrb[0].mxu0
    %v411 = vadd.f32 0.0, %v410
    %v412 = vpop.f32.mrb[0].mxu0
    %v413 = vpop.f32.mrb[0].mxu0
    %v414 = vpop.f32.mrb[0].mxu0
    %415 = vdwg.mxu0
    %v417 = vsel %vm150, %v258, 0
    %v420 = vsel %vm214, %v70, 0
    %422 = vmatprep.subr.bf16.mxu0 0
    %423 = vmatpush1.bf16.msra.mxu0 %v420
    %424 = vmatprep.subr.bf16.mxu0 0
    %425 = vmatpush1.bf16.msra.mxu0 0
    %426 = vmatprep.subr.bf16.mxu0 0
    %427 = vmatpush1.bf16.msra.mxu0 0
    %428 = vmatprep.subr.bf16.mxu0 0
    %429 = vmatpush1.bf16.msra.mxu0 0
    %430 = vmatprep.subr.bf16.mxu0 0
    %431 = vmatpush1.bf16.msra.mxu0 0
    %432 = vmatprep.subr.bf16.mxu0 0
    %433 = vmatpush1.bf16.msra.mxu0 0
    %434 = vmatprep.subr.bf16.mxu0 0
    %435 = vmatpush1.bf16.msra.mxu0 0
    %436 = vmatprep.subr.bf16.mxu0 0
    %437 = vmatpush1.bf16.msra.mxu0 0
    %438 = vmatprep.subr.bf16.mxu0 0
    %439 = vmatpush1.bf16.msra.mxu0 0
    %440 = vmatprep.subr.bf16.mxu0 0
    %441 = vmatpush1.bf16.msra.mxu0 0
    %442 = vmatprep.subr.bf16.mxu0 0
    %443 = vmatpush1.bf16.msra.mxu0 0
    %444 = vmatprep.subr.bf16.mxu0 0
    %445 = vmatpush1.bf16.msra.mxu0 0
    %446 = vmatprep.subr.bf16.mxu0 0
    %447 = vmatpush1.bf16.msra.mxu0 0
    %448 = vmatprep.subr.bf16.mxu0 0
    %449 = vmatpush1.bf16.msra.mxu0 0
    %450 = vmatprep.subr.bf16.mxu0 0
    %451 = vmatpush1.bf16.msra.mxu0 0
    %452 = vmatprep.subr.bf16.mxu0 0
    %453 = vmatpush1.bf16.msra.mxu0 0
    %454 = vmatprep.mubr.bf16.mxu0 0
    %455 = vmatmul.mubr.bf16.gmra.mrb[0].mxu0 %v417
    %v456 = vpop.f32.mrb[0].mxu0
    %v457 = vadd.f32 %v411, %v456
    %v458 = vpop.f32.mrb[0].mxu0
    %v459 = vpop.f32.mrb[0].mxu0
    %v460 = vpop.f32.mrb[0].mxu0
    %461 = vdwg.mxu0
    %462 = vrot.lane.b32.xlu0 %v138, 112
    %v463 = vpop.permute.xlu0 %462
    %464 = vrot.lane.b32.xlu0 %v138, 80
    %v465 = vpop.permute.xlu0 %464
    %v467 = vsel %vm150, %v463, 0
    %v470 = vsel %vm150, %v465, 0
    %472 = vmatprep.subr.bf16.mxu0 0
    %473 = vmatpush1.bf16.xpose.msra.mxu0 %v470
    %474 = vmatprep.subr.bf16.mxu0 0
    %475 = vmatpush1.bf16.xpose.msra.mxu0 0
    %476 = vmatprep.subr.bf16.mxu0 0
    %477 = vmatpush1.bf16.xpose.msra.mxu0 0
    %478 = vmatprep.subr.bf16.mxu0 0
    %479 = vmatpush1.bf16.xpose.msra.mxu0 0
    %480 = vmatprep.subr.bf16.mxu0 0
    %481 = vmatpush1.bf16.xpose.msra.mxu0 0
    %482 = vmatprep.subr.bf16.mxu0 0
    %483 = vmatpush1.bf16.xpose.msra.mxu0 0
    %484 = vmatprep.subr.bf16.mxu0 0
    %485 = vmatpush1.bf16.xpose.msra.mxu0 0
    %486 = vmatprep.subr.bf16.mxu0 0
    %487 = vmatpush1.bf16.xpose.msra.mxu0 0
    %488 = vmatprep.subr.bf16.mxu0 0
    %489 = vmatpush1.bf16.xpose.msra.mxu0 0
    %490 = vmatprep.subr.bf16.mxu0 0
    %491 = vmatpush1.bf16.xpose.msra.mxu0 0
    %492 = vmatprep.subr.bf16.mxu0 0
    %493 = vmatpush1.bf16.xpose.msra.mxu0 0
    %494 = vmatprep.subr.bf16.mxu0 0
    %495 = vmatpush1.bf16.xpose.msra.mxu0 0
    %496 = vmatprep.subr.bf16.mxu0 0
    %497 = vmatpush1.bf16.xpose.msra.mxu0 0
    %498 = vmatprep.subr.bf16.mxu0 0
    %499 = vmatpush1.bf16.xpose.msra.mxu0 0
    %500 = vmatprep.subr.bf16.mxu0 0
    %501 = vmatpush1.bf16.xpose.msra.mxu0 0
    %502 = vmatprep.subr.bf16.mxu0 0
    %503 = vmatpush1.bf16.xpose.msra.mxu0 0
    %504 = vmatprep.mubr.bf16.mxu0 0
    %505 = vmatmul.mubr.bf16.gmra.mrb[0].mxu0 %v467
    %v506 = vpop.f32.mrb[0].mxu0
    %v507 = vadd.f32 %v145, %v506
    %v508 = vpop.f32.mrb[0].mxu0
    %v509 = vpop.f32.mrb[0].mxu0
    %v510 = vpop.f32.mrb[0].mxu0
    %511 = vdwg.mxu0
    %v512 = vsel %vm150, %v507, -inf
    %513 = vmax.xlane.f32.xlu0 %v512
    %v514 = vpop.xlane.xlu0 %513
    %v515 = vsub.f32 %v507, %v514
    %v516 = vmul.f32 %v515, 1.442695
    %v517 = vpow.pop %v516
    %v518 = vsel %vm150, %v517, 0.0
    %519 = vadd.xlane.f32.xlu0 %v518
    %v520 = vpop.xlane.xlu0 %519
    %v521 = vrcp.pop %v520
    %v522 = vmul.f32 %v517, %v521
    %v523 = vpack.c.bf16 %v522, %v522
    %524 = vrot.lane.b32.xlu0 %v138, 48
    %v525 = vpop.permute.xlu0 %524
    %v527 = vsel %vm150, %v523, 0
    %v530 = vsel %vm214, %v525, 0
    %532 = vmatprep.subr.bf16.mxu0 0
    %533 = vmatpush1.bf16.msra.mxu0 %v530
    %534 = vmatprep.subr.bf16.mxu0 0
    %535 = vmatpush1.bf16.msra.mxu0 0
    %536 = vmatprep.subr.bf16.mxu0 0
    %537 = vmatpush1.bf16.msra.mxu0 0
    %538 = vmatprep.subr.bf16.mxu0 0
    %539 = vmatpush1.bf16.msra.mxu0 0
    %540 = vmatprep.subr.bf16.mxu0 0
    %541 = vmatpush1.bf16.msra.mxu0 0
    %542 = vmatprep.subr.bf16.mxu0 0
    %543 = vmatpush1.bf16.msra.mxu0 0
    %544 = vmatprep.subr.bf16.mxu0 0
    %545 = vmatpush1.bf16.msra.mxu0 0
    %546 = vmatprep.subr.bf16.mxu0 0
    %547 = vmatpush1.bf16.msra.mxu0 0
    %548 = vmatprep.subr.bf16.mxu0 0
    %549 = vmatpush1.bf16.msra.mxu0 0
    %550 = vmatprep.subr.bf16.mxu0 0
    %551 = vmatpush1.bf16.msra.mxu0 0
    %552 = vmatprep.subr.bf16.mxu0 0
    %553 = vmatpush1.bf16.msra.mxu0 0
    %554 = vmatprep.subr.bf16.mxu0 0
    %555 = vmatpush1.bf16.msra.mxu0 0
    %556 = vmatprep.subr.bf16.mxu0 0
    %557 = vmatpush1.bf16.msra.mxu0 0
    %558 = vmatprep.subr.bf16.mxu0 0
    %559 = vmatpush1.bf16.msra.mxu0 0
    %560 = vmatprep.subr.bf16.mxu0 0
    %561 = vmatpush1.bf16.msra.mxu0 0
    %562 = vmatprep.subr.bf16.mxu0 0
    %563 = vmatpush1.bf16.msra.mxu0 0
    %564 = vmatprep.mubr.bf16.mxu0 0
    %565 = vmatmul.mubr.bf16.gmra.mrb[0].mxu0 %v527
    %v566 = vpop.f32.mrb[0].mxu0
    %v567 = vadd.f32 0.0, %v566
    %v568 = vpop.f32.mrb[0].mxu0
    %v569 = vpop.f32.mrb[0].mxu0
    %v570 = vpop.f32.mrb[0].mxu0
    %571 = vdwg.mxu0
    %v572 = vpack.c.bf16 %v567, %v567
    %v574 = vsel %vm150, %v572, 0
    %v577 = vsel %vm214, %v72, 0
    %579 = vmatprep.subr.bf16.mxu0 0
    %580 = vmatpush1.bf16.msra.mxu0 %v577
    %581 = vmatprep.subr.bf16.mxu0 0
    %582 = vmatpush1.bf16.msra.mxu0 0
    %583 = vmatprep.subr.bf16.mxu0 0
    %584 = vmatpush1.bf16.msra.mxu0 0
    %585 = vmatprep.subr.bf16.mxu0 0
    %586 = vmatpush1.bf16.msra.mxu0 0
    %587 = vmatprep.subr.bf16.mxu0 0
    %588 = vmatpush1.bf16.msra.mxu0 0
    %589 = vmatprep.subr.bf16.mxu0 0
    %590 = vmatpush1.bf16.msra.mxu0 0
    %591 = vmatprep.subr.bf16.mxu0 0
    %592 = vmatpush1.bf16.msra.mxu0 0
    %593 = vmatprep.subr.bf16.mxu0 0
    %594 = vmatpush1.bf16.msra.mxu0 0
    %595 = vmatprep.subr.bf16.mxu0 0
    %596 = vmatpush1.bf16.msra.mxu0 0
    %597 = vmatprep.subr.bf16.mxu0 0
    %598 = vmatpush1.bf16.msra.mxu0 0
    %599 = vmatprep.subr.bf16.mxu0 0
    %600 = vmatpush1.bf16.msra.mxu0 0
    %601 = vmatprep.subr.bf16.mxu0 0
    %602 = vmatpush1.bf16.msra.mxu0 0
    %603 = vmatprep.subr.bf16.mxu0 0
    %604 = vmatpush1.bf16.msra.mxu0 0
    %605 = vmatprep.subr.bf16.mxu0 0
    %606 = vmatpush1.bf16.msra.mxu0 0
    %607 = vmatprep.subr.bf16.mxu0 0
    %608 = vmatpush1.bf16.msra.mxu0 0
    %609 = vmatprep.subr.bf16.mxu0 0
    %610 = vmatpush1.bf16.msra.mxu0 0
    %611 = vmatprep.mubr.bf16.mxu0 0
    %612 = vmatmul.mubr.bf16.gmra.mrb[0].mxu0 %v574
    %v613 = vpop.f32.mrb[0].mxu0
    %v614 = vadd.f32 0.0, %v613
    %v615 = vpop.f32.mrb[0].mxu0
    %v616 = vpop.f32.mrb[0].mxu0
    %v617 = vpop.f32.mrb[0].mxu0
    %618 = vdwg.mxu0
    %v619 = vadd.f32 %v457, %v614
    %620 = vrot.lane.b32.xlu0 %v138, 104
    %v621 = vpop.permute.xlu0 %620
    %622 = vrot.lane.b32.xlu0 %v138, 72
    %v623 = vpop.permute.xlu0 %622
    %v625 = vsel %vm150, %v621, 0
    %v628 = vsel %vm150, %v623, 0
    %630 = vmatprep.subr.bf16.mxu0 0
    %631 = vmatpush1.bf16.xpose.msra.mxu0 %v628
    %632 = vmatprep.subr.bf16.mxu0 0
    %633 = vmatpush1.bf16.xpose.msra.mxu0 0
    %634 = vmatprep.subr.bf16.mxu0 0
    %635 = vmatpush1.bf16.xpose.msra.mxu0 0
    %636 = vmatprep.subr.bf16.mxu0 0
    %637 = vmatpush1.bf16.xpose.msra.mxu0 0
    %638 = vmatprep.subr.bf16.mxu0 0
    %639 = vmatpush1.bf16.xpose.msra.mxu0 0
    %640 = vmatprep.subr.bf16.mxu0 0
    %641 = vmatpush1.bf16.xpose.msra.mxu0 0
    %642 = vmatprep.subr.bf16.mxu0 0
    %643 = vmatpush1.bf16.xpose.msra.mxu0 0
    %644 = vmatprep.subr.bf16.mxu0 0
    %645 = vmatpush1.bf16.xpose.msra.mxu0 0
    %646 = vmatprep.subr.bf16.mxu0 0
    %647 = vmatpush1.bf16.xpose.msra.mxu0 0
    %648 = vmatprep.subr.bf16.mxu0 0
    %649 = vmatpush1.bf16.xpose.msra.mxu0 0
    %650 = vmatprep.subr.bf16.mxu0 0
    %651 = vmatpush1.bf16.xpose.msra.mxu0 0
    %652 = vmatprep.subr.bf16.mxu0 0
    %653 = vmatpush1.bf16.xpose.msra.mxu0 0
    %654 = vmatprep.subr.bf16.mxu0 0
    %655 = vmatpush1.bf16.xpose.msra.mxu0 0
    %656 = vmatprep.subr.bf16.mxu0 0
    %657 = vmatpush1.bf16.xpose.msra.mxu0 0
    %658 = vmatprep.subr.bf16.mxu0 0
    %659 = vmatpush1.bf16.xpose.msra.mxu0 0
    %660 = vmatprep.subr.bf16.mxu0 0
    %661 = vmatpush1.bf16.xpose.msra.mxu0 0
    %662 = vmatprep.mubr.bf16.mxu0 0
    %663 = vmatmul.mubr.bf16.gmra.mrb[0].mxu0 %v625
    %v664 = vpop.f32.mrb[0].mxu0
    %v665 = vadd.f32 %v145, %v664
    %v666 = vpop.f32.mrb[0].mxu0
    %v667 = vpop.f32.mrb[0].mxu0
    %v668 = vpop.f32.mrb[0].mxu0
    %669 = vdwg.mxu0
    %v670 = vsel %vm150, %v665, -inf
    %671 = vmax.xlane.f32.xlu0 %v670
    %v672 = vpop.xlane.xlu0 %671
    %v673 = vsub.f32 %v665, %v672
    %v674 = vmul.f32 %v673, 1.442695
    %v675 = vpow.pop %v674
    %v676 = vsel %vm150, %v675, 0.0
    %677 = vadd.xlane.f32.xlu0 %v676
    %v678 = vpop.xlane.xlu0 %677
    %v679 = vrcp.pop %v678
    %v680 = vmul.f32 %v675, %v679
    %v681 = vpack.c.bf16 %v680, %v680
    %682 = vrot.lane.b32.xlu0 %v138, 40
    %v683 = vpop.permute.xlu0 %682
    %v685 = vsel %vm150, %v681, 0
    %v688 = vsel %vm214, %v683, 0
    %690 = vmatprep.subr.bf16.mxu0 0
    %691 = vmatpush1.bf16.msra.mxu0 %v688
    %692 = vmatprep.subr.bf16.mxu0 0
    %693 = vmatpush1.bf16.msra.mxu0 0
    %694 = vmatprep.subr.bf16.mxu0 0
    %695 = vmatpush1.bf16.msra.mxu0 0
    %696 = vmatprep.subr.bf16.mxu0 0
    %697 = vmatpush1.bf16.msra.mxu0 0
    %698 = vmatprep.subr.bf16.mxu0 0
    %699 = vmatpush1.bf16.msra.mxu0 0
    %700 = vmatprep.subr.bf16.mxu0 0
    %701 = vmatpush1.bf16.msra.mxu0 0
    %702 = vmatprep.subr.bf16.mxu0 0
    %703 = vmatpush1.bf16.msra.mxu0 0
    %704 = vmatprep.subr.bf16.mxu0 0
    %705 = vmatpush1.bf16.msra.mxu0 0
    %706 = vmatprep.subr.bf16.mxu0 0
    %707 = vmatpush1.bf16.msra.mxu0 0
    %708 = vmatprep.subr.bf16.mxu0 0
    %709 = vmatpush1.bf16.msra.mxu0 0
    %710 = vmatprep.subr.bf16.mxu0 0
    %711 = vmatpush1.bf16.msra.mxu0 0
    %712 = vmatprep.subr.bf16.mxu0 0
    %713 = vmatpush1.bf16.msra.mxu0 0
    %714 = vmatprep.subr.bf16.mxu0 0
    %715 = vmatpush1.bf16.msra.mxu0 0
    %716 = vmatprep.subr.bf16.mxu0 0
    %717 = vmatpush1.bf16.msra.mxu0 0
    %718 = vmatprep.subr.bf16.mxu0 0
    %719 = vmatpush1.bf16.msra.mxu0 0
    %720 = vmatprep.subr.bf16.mxu0 0
    %721 = vmatpush1.bf16.msra.mxu0 0
    %722 = vmatprep.mubr.bf16.mxu0 0
    %723 = vmatmul.mubr.bf16.gmra.mrb[0].mxu0 %v685
    %v724 = vpop.f32.mrb[0].mxu0
    %v725 = vadd.f32 0.0, %v724
    %v726 = vpop.f32.mrb[0].mxu0
    %v727 = vpop.f32.mrb[0].mxu0
    %v728 = vpop.f32.mrb[0].mxu0
    %729 = vdwg.mxu0
    %v730 = vpack.c.bf16 %v725, %v725
    %v732 = vsel %vm150, %v730, 0
    %v735 = vsel %vm214, %v73, 0
    %737 = vmatprep.subr.bf16.mxu0 0
    %738 = vmatpush1.bf16.msra.mxu0 %v735
    %739 = vmatprep.subr.bf16.mxu0 0
    %740 = vmatpush1.bf16.msra.mxu0 0
    %741 = vmatprep.subr.bf16.mxu0 0
    %742 = vmatpush1.bf16.msra.mxu0 0
    %743 = vmatprep.subr.bf16.mxu0 0
    %744 = vmatpush1.bf16.msra.mxu0 0
    %745 = vmatprep.subr.bf16.mxu0 0
    %746 = vmatpush1.bf16.msra.mxu0 0
    %747 = vmatprep.subr.bf16.mxu0 0
    %748 = vmatpush1.bf16.msra.mxu0 0
    %749 = vmatprep.subr.bf16.mxu0 0
    %750 = vmatpush1.bf16.msra.mxu0 0
    %751 = vmatprep.subr.bf16.mxu0 0
    %752 = vmatpush1.bf16.msra.mxu0 0
    %753 = vmatprep.subr.bf16.mxu0 0
    %754 = vmatpush1.bf16.msra.mxu0 0
    %755 = vmatprep.subr.bf16.mxu0 0
    %756 = vmatpush1.bf16.msra.mxu0 0
    %757 = vmatprep.subr.bf16.mxu0 0
    %758 = vmatpush1.bf16.msra.mxu0 0
    %759 = vmatprep.subr.bf16.mxu0 0
    %760 = vmatpush1.bf16.msra.mxu0 0
    %761 = vmatprep.subr.bf16.mxu0 0
    %762 = vmatpush1.bf16.msra.mxu0 0
    %763 = vmatprep.subr.bf16.mxu0 0
    %764 = vmatpush1.bf16.msra.mxu0 0
    %765 = vmatprep.subr.bf16.mxu0 0
    %766 = vmatpush1.bf16.msra.mxu0 0
    %767 = vmatprep.subr.bf16.mxu0 0
    %768 = vmatpush1.bf16.msra.mxu0 0
    %769 = vmatprep.mubr.bf16.mxu0 0
    %770 = vmatmul.mubr.bf16.gmra.mrb[0].mxu0 %v732
    %v771 = vpop.f32.mrb[0].mxu0
    %v772 = vadd.f32 0.0, %v771
    %v773 = vpop.f32.mrb[0].mxu0
    %v774 = vpop.f32.mrb[0].mxu0
    %v775 = vpop.f32.mrb[0].mxu0
    %776 = vdwg.mxu0
    %v777 = vadd.f32 %v619, %v772
    %v779 = vlaneseq
    %v780 = vshrl.u32 %v779, 7
    %v781 = vsub.s32 0, %v780
    %v782 = vrot.slane %v146, %v781
    %v784 = vadd.f32 %v777, %v782
    %785 = vst.msk [vmem:[#allocation8] sm:$0xff] %vm93, %v784
    %v786 = vrot.slane %v138, 4
    %787 = vrot.lane.b32.xlu0 %v786, 96
    %v788 = vpop.permute.xlu0 %787
    %v790 = vsel %vm150, %v786, 0
    %v793 = vsel %vm150, %v788, 0
    %795 = vmatprep.subr.bf16.mxu0 0
    %796 = vmatpush1.bf16.xpose.msra.mxu0 %v793
    %797 = vmatprep.subr.bf16.mxu0 0
    %798 = vmatpush1.bf16.xpose.msra.mxu0 0
    %799 = vmatprep.subr.bf16.mxu0 0
    %800 = vmatpush1.bf16.xpose.msra.mxu0 0
    %801 = vmatprep.subr.bf16.mxu0 0
    %802 = vmatpush1.bf16.xpose.msra.mxu0 0
    %803 = vmatprep.subr.bf16.mxu0 0
    %804 = vmatpush1.bf16.xpose.msra.mxu0 0
    %805 = vmatprep.subr.bf16.mxu0 0
    %806 = vmatpush1.bf16.xpose.msra.mxu0 0
    %807 = vmatprep.subr.bf16.mxu0 0
    %808 = vmatpush1.bf16.xpose.msra.mxu0 0
    %809 = vmatprep.subr.bf16.mxu0 0
    %810 = vmatpush1.bf16.xpose.msra.mxu0 0
    %811 = vmatprep.subr.bf16.mxu0 0
    %812 = vmatpush1.bf16.xpose.msra.mxu0 0
    %813 = vmatprep.subr.bf16.mxu0 0
    %814 = vmatpush1.bf16.xpose.msra.mxu0 0
    %815 = vmatprep.subr.bf16.mxu0 0
    %816 = vmatpush1.bf16.xpose.msra.mxu0 0
    %817 = vmatprep.subr.bf16.mxu0 0
    %818 = vmatpush1.bf16.xpose.msra.mxu0 0
    %819 = vmatprep.subr.bf16.mxu0 0
    %820 = vmatpush1.bf16.xpose.msra.mxu0 0
    %821 = vmatprep.subr.bf16.mxu0 0
    %822 = vmatpush1.bf16.xpose.msra.mxu0 0
    %823 = vmatprep.subr.bf16.mxu0 0
    %824 = vmatpush1.bf16.xpose.msra.mxu0 0
    %825 = vmatprep.subr.bf16.mxu0 0
    %826 = vmatpush1.bf16.xpose.msra.mxu0 0
    %827 = vmatprep.mubr.bf16.mxu0 0
    %828 = vmatmul.mubr.bf16.gmra.mrb[0].mxu0 %v790
    %v829 = vpop.f32.mrb[0].mxu0
    %v830 = vadd.f32 %v145, %v829
    %v831 = vpop.f32.mrb[0].mxu0
    %v832 = vpop.f32.mrb[0].mxu0
    %v833 = vpop.f32.mrb[0].mxu0
    %834 = vdwg.mxu0
    %v835 = vsel %vm150, %v830, -inf
    %836 = vmax.xlane.f32.xlu0 %v835
    %v837 = vpop.xlane.xlu0 %836
    %v838 = vsub.f32 %v830, %v837
    %v839 = vmul.f32 %v838, 1.442695
    %v840 = vpow.pop %v839
    %v841 = vsel %vm150, %v840, 0.0
    %842 = vadd.xlane.f32.xlu0 %v841
    %v843 = vpop.xlane.xlu0 %842
    %v844 = vrcp.pop %v843
    %v845 = vmul.f32 %v840, %v844
    %v846 = vpack.c.bf16 %v845, %v845
    %847 = vrot.lane.b32.xlu0 %v786, 64
    %v848 = vpop.permute.xlu0 %847
    %v850 = vsel %vm150, %v846, 0
    %v853 = vsel %vm214, %v848, 0
    %855 = vmatprep.subr.bf16.mxu0 0
    %856 = vmatpush1.bf16.msra.mxu0 %v853
    %857 = vmatprep.subr.bf16.mxu0 0
    %858 = vmatpush1.bf16.msra.mxu0 0
    %859 = vmatprep.subr.bf16.mxu0 0
    %860 = vmatpush1.bf16.msra.mxu0 0
    %861 = vmatprep.subr.bf16.mxu0 0
    %862 = vmatpush1.bf16.msra.mxu0 0
    %863 = vmatprep.subr.bf16.mxu0 0
    %864 = vmatpush1.bf16.msra.mxu0 0
    %865 = vmatprep.subr.bf16.mxu0 0
    %866 = vmatpush1.bf16.msra.mxu0 0
    %867 = vmatprep.subr.bf16.mxu0 0
    %868 = vmatpush1.bf16.msra.mxu0 0
    %869 = vmatprep.subr.bf16.mxu0 0
    %870 = vmatpush1.bf16.msra.mxu0 0
    %871 = vmatprep.subr.bf16.mxu0 0
    %872 = vmatpush1.bf16.msra.mxu0 0
    %873 = vmatprep.subr.bf16.mxu0 0
    %874 = vmatpush1.bf16.msra.mxu0 0
    %875 = vmatprep.subr.bf16.mxu0 0
    %876 = vmatpush1.bf16.msra.mxu0 0
    %877 = vmatprep.subr.bf16.mxu0 0
    %878 = vmatpush1.bf16.msra.mxu0 0
    %879 = vmatprep.subr.bf16.mxu0 0
    %880 = vmatpush1.bf16.msra.mxu0 0
    %881 = vmatprep.subr.bf16.mxu0 0
    %882 = vmatpush1.bf16.msra.mxu0 0
    %883 = vmatprep.subr.bf16.mxu0 0
    %884 = vmatpush1.bf16.msra.mxu0 0
    %885 = vmatprep.subr.bf16.mxu0 0
    %886 = vmatpush1.bf16.msra.mxu0 0
    %887 = vmatprep.mubr.bf16.mxu0 0
    %888 = vmatmul.mubr.bf16.gmra.mrb[0].mxu0 %v850
    %v889 = vpop.f32.mrb[0].mxu0
    %v890 = vadd.f32 0.0, %v889
    %v891 = vpop.f32.mrb[0].mxu0
    %v892 = vpop.f32.mrb[0].mxu0
    %v893 = vpop.f32.mrb[0].mxu0
    %894 = vdwg.mxu0
    %v895 = vpack.c.bf16 %v890, %v890
    %896 = vrot.lane.b32.xlu0 %v786, 120
    %v897 = vpop.permute.xlu0 %896
    %898 = vrot.lane.b32.xlu0 %v786, 88
    %v899 = vpop.permute.xlu0 %898
    %v901 = vsel %vm150, %v897, 0
    %v904 = vsel %vm150, %v899, 0
    %906 = vmatprep.subr.bf16.mxu0 0
    %907 = vmatpush1.bf16.xpose.msra.mxu0 %v904
    %908 = vmatprep.subr.bf16.mxu0 0
    %909 = vmatpush1.bf16.xpose.msra.mxu0 0
    %910 = vmatprep.subr.bf16.mxu0 0
    %911 = vmatpush1.bf16.xpose.msra.mxu0 0
    %912 = vmatprep.subr.bf16.mxu0 0
    %913 = vmatpush1.bf16.xpose.msra.mxu0 0
    %914 = vmatprep.subr.bf16.mxu0 0
    %915 = vmatpush1.bf16.xpose.msra.mxu0 0
    %916 = vmatprep.subr.bf16.mxu0 0
    %917 = vmatpush1.bf16.xpose.msra.mxu0 0
    %918 = vmatprep.subr.bf16.mxu0 0
    %919 = vmatpush1.bf16.xpose.msra.mxu0 0
    %920 = vmatprep.subr.bf16.mxu0 0
    %921 = vmatpush1.bf16.xpose.msra.mxu0 0
    %922 = vmatprep.subr.bf16.mxu0 0
    %923 = vmatpush1.bf16.xpose.msra.mxu0 0
    %924 = vmatprep.subr.bf16.mxu0 0
    %925 = vmatpush1.bf16.xpose.msra.mxu0 0
    %926 = vmatprep.subr.bf16.mxu0 0
    %927 = vmatpush1.bf16.xpose.msra.mxu0 0
    %928 = vmatprep.subr.bf16.mxu0 0
    %929 = vmatpush1.bf16.xpose.msra.mxu0 0
    %930 = vmatprep.subr.bf16.mxu0 0
    %931 = vmatpush1.bf16.xpose.msra.mxu0 0
    %932 = vmatprep.subr.bf16.mxu0 0
    %933 = vmatpush1.bf16.xpose.msra.mxu0 0
    %934 = vmatprep.subr.bf16.mxu0 0
    %935 = vmatpush1.bf16.xpose.msra.mxu0 0
    %936 = vmatprep.subr.bf16.mxu0 0
    %937 = vmatpush1.bf16.xpose.msra.mxu0 0
    %938 = vmatprep.mubr.bf16.mxu0 0
    %939 = vmatmul.mubr.bf16.gmra.mrb[0].mxu0 %v901
    %v940 = vpop.f32.mrb[0].mxu0
    %v941 = vadd.f32 %v145, %v940
    %v942 = vpop.f32.mrb[0].mxu0
    %v943 = vpop.f32.mrb[0].mxu0
    %v944 = vpop.f32.mrb[0].mxu0
    %945 = vdwg.mxu0
    %v946 = vsel %vm150, %v941, -inf
    %947 = vmax.xlane.f32.xlu0 %v946
    %v948 = vpop.xlane.xlu0 %947
    %v949 = vsub.f32 %v941, %v948
    %v950 = vmul.f32 %v949, 1.442695
    %v951 = vpow.pop %v950
    %v952 = vsel %vm150, %v951, 0.0
    %953 = vadd.xlane.f32.xlu0 %v952
    %v954 = vpop.xlane.xlu0 %953
    %v955 = vrcp.pop %v954
    %v956 = vmul.f32 %v951, %v955
    %v957 = vpack.c.bf16 %v956, %v956
    %958 = vrot.lane.b32.xlu0 %v786, 56
    %v959 = vpop.permute.xlu0 %958
    %v961 = vsel %vm150, %v957, 0
    %v964 = vsel %vm214, %v959, 0
    %966 = vmatprep.subr.bf16.mxu0 0
    %967 = vmatpush1.bf16.msra.mxu0 %v964
    %968 = vmatprep.subr.bf16.mxu0 0
    %969 = vmatpush1.bf16.msra.mxu0 0
    %970 = vmatprep.subr.bf16.mxu0 0
    %971 = vmatpush1.bf16.msra.mxu0 0
    %972 = vmatprep.subr.bf16.mxu0 0
    %973 = vmatpush1.bf16.msra.mxu0 0
    %974 = vmatprep.subr.bf16.mxu0 0
    %975 = vmatpush1.bf16.msra.mxu0 0
    %976 = vmatprep.subr.bf16.mxu0 0
    %977 = vmatpush1.bf16.msra.mxu0 0
    %978 = vmatprep.subr.bf16.mxu0 0
    %979 = vmatpush1.bf16.msra.mxu0 0
    %980 = vmatprep.subr.bf16.mxu0 0
    %981 = vmatpush1.bf16.msra.mxu0 0
    %982 = vmatprep.subr.bf16.mxu0 0
    %983 = vmatpush1.bf16.msra.mxu0 0
    %984 = vmatprep.subr.bf16.mxu0 0
    %985 = vmatpush1.bf16.msra.mxu0 0
    %986 = vmatprep.subr.bf16.mxu0 0
    %987 = vmatpush1.bf16.msra.mxu0 0
    %988 = vmatprep.subr.bf16.mxu0 0
    %989 = vmatpush1.bf16.msra.mxu0 0
    %990 = vmatprep.subr.bf16.mxu0 0
    %991 = vmatpush1.bf16.msra.mxu0 0
    %992 = vmatprep.subr.bf16.mxu0 0
    %993 = vmatpush1.bf16.msra.mxu0 0
    %994 = vmatprep.subr.bf16.mxu0 0
    %995 = vmatpush1.bf16.msra.mxu0 0
    %996 = vmatprep.subr.bf16.mxu0 0
    %997 = vmatpush1.bf16.msra.mxu0 0
    %998 = vmatprep.mubr.bf16.mxu0 0
    %999 = vmatmul.mubr.bf16.gmra.mrb[0].mxu0 %v961
    %v1000 = vpop.f32.mrb[0].mxu0
    %v1001 = vadd.f32 0.0, %v1000
    %v1002 = vpop.f32.mrb[0].mxu0
    %v1003 = vpop.f32.mrb[0].mxu0
    %v1004 = vpop.f32.mrb[0].mxu0
    %1005 = vdwg.mxu0
    %v1006 = vpack.c.bf16 %v1001, %v1001
    %v1008 = vsel %vm150, %v1006, 0
    %1010 = vmatprep.subr.bf16.mxu0 0
    %1011 = vmatpush1.bf16.msra.mxu0 %v374
    %1012 = vmatprep.subr.bf16.mxu0 0
    %1013 = vmatpush1.bf16.msra.mxu0 0
    %1014 = vmatprep.subr.bf16.mxu0 0
    %1015 = vmatpush1.bf16.msra.mxu0 0
    %1016 = vmatprep.subr.bf16.mxu0 0
    %1017 = vmatpush1.bf16.msra.mxu0 0
    %1018 = vmatprep.subr.bf16.mxu0 0
    %1019 = vmatpush1.bf16.msra.mxu0 0
    %1020 = vmatprep.subr.bf16.mxu0 0
    %1021 = vmatpush1.bf16.msra.mxu0 0
    %1022 = vmatprep.subr.bf16.mxu0 0
    %1023 = vmatpush1.bf16.msra.mxu0 0
    %1024 = vmatprep.subr.bf16.mxu0 0
    %1025 = vmatpush1.bf16.msra.mxu0 0
    %1026 = vmatprep.subr.bf16.mxu0 0
    %1027 = vmatpush1.bf16.msra.mxu0 0
    %1028 = vmatprep.subr.bf16.mxu0 0
    %1029 = vmatpush1.bf16.msra.mxu0 0
    %1030 = vmatprep.subr.bf16.mxu0 0
    %1031 = vmatpush1.bf16.msra.mxu0 0
    %1032 = vmatprep.subr.bf16.mxu0 0
    %1033 = vmatpush1.bf16.msra.mxu0 0
    %1034 = vmatprep.subr.bf16.mxu0 0
    %1035 = vmatpush1.bf16.msra.mxu0 0
    %1036 = vmatprep.subr.bf16.mxu0 0
    %1037 = vmatpush1.bf16.msra.mxu0 0
    %1038 = vmatprep.subr.bf16.mxu0 0
    %1039 = vmatpush1.bf16.msra.mxu0 0
    %1040 = vmatprep.subr.bf16.mxu0 0
    %1041 = vmatpush1.bf16.msra.mxu0 0
    %1042 = vmatprep.mubr.bf16.mxu0 0
    %1043 = vmatmul.mubr.bf16.gmra.mrb[0].mxu0 %v1008
    %v1044 = vpop.f32.mrb[0].mxu0
    %v1045 = vadd.f32 0.0, %v1044
    %v1046 = vpop.f32.mrb[0].mxu0
    %v1047 = vpop.f32.mrb[0].mxu0
    %v1048 = vpop.f32.mrb[0].mxu0
    %1049 = vdwg.mxu0
    %v1051 = vsel %vm150, %v895, 0
    %1053 = vmatprep.subr.bf16.mxu0 0
    %1054 = vmatpush1.bf16.msra.mxu0 %v420
    %1055 = vmatprep.subr.bf16.mxu0 0
    %1056 = vmatpush1.bf16.msra.mxu0 0
    %1057 = vmatprep.subr.bf16.mxu0 0
    %1058 = vmatpush1.bf16.msra.mxu0 0
    %1059 = vmatprep.subr.bf16.mxu0 0
    %1060 = vmatpush1.bf16.msra.mxu0 0
    %1061 = vmatprep.subr.bf16.mxu0 0
    %1062 = vmatpush1.bf16.msra.mxu0 0
    %1063 = vmatprep.subr.bf16.mxu0 0
    %1064 = vmatpush1.bf16.msra.mxu0 0
    %1065 = vmatprep.subr.bf16.mxu0 0
    %1066 = vmatpush1.bf16.msra.mxu0 0
    %1067 = vmatprep.subr.bf16.mxu0 0
    %1068 = vmatpush1.bf16.msra.mxu0 0
    %1069 = vmatprep.subr.bf16.mxu0 0
    %1070 = vmatpush1.bf16.msra.mxu0 0
    %1071 = vmatprep.subr.bf16.mxu0 0
    %1072 = vmatpush1.bf16.msra.mxu0 0
    %1073 = vmatprep.subr.bf16.mxu0 0
    %1074 = vmatpush1.bf16.msra.mxu0 0
    %1075 = vmatprep.subr.bf16.mxu0 0
    %1076 = vmatpush1.bf16.msra.mxu0 0
    %1077 = vmatprep.subr.bf16.mxu0 0
    %1078 = vmatpush1.bf16.msra.mxu0 0
    %1079 = vmatprep.subr.bf16.mxu0 0
    %1080 = vmatpush1.bf16.msra.mxu0 0
    %1081 = vmatprep.subr.bf16.mxu0 0
    %1082 = vmatpush1.bf16.msra.mxu0 0
    %1083 = vmatprep.subr.bf16.mxu0 0
    %1084 = vmatpush1.bf16.msra.mxu0 0
    %1085 = vmatprep.mubr.bf16.mxu0 0
    %1086 = vmatmul.mubr.bf16.gmra.mrb[0].mxu0 %v1051
    %v1087 = vpop.f32.mrb[0].mxu0
    %v1088 = vadd.f32 %v1045, %v1087
    %v1089 = vpop.f32.mrb[0].mxu0
    %v1090 = vpop.f32.mrb[0].mxu0
    %v1091 = vpop.f32.mrb[0].mxu0
    %1092 = vdwg.mxu0
    %1093 = vrot.lane.b32.xlu0 %v786, 112
    %v1094 = vpop.permute.xlu0 %1093
    %1095 = vrot.lane.b32.xlu0 %v786, 80
    %v1096 = vpop.permute.xlu0 %1095
    %v1098 = vsel %vm150, %v1094, 0
    %v1101 = vsel %vm150, %v1096, 0
    %1103 = vmatprep.subr.bf16.mxu0 0
    %1104 = vmatpush1.bf16.xpose.msra.mxu0 %v1101
    %1105 = vmatprep.subr.bf16.mxu0 0
    %1106 = vmatpush1.bf16.xpose.msra.mxu0 0
    %1107 = vmatprep.subr.bf16.mxu0 0
    %1108 = vmatpush1.bf16.xpose.msra.mxu0 0
    %1109 = vmatprep.subr.bf16.mxu0 0
    %1110 = vmatpush1.bf16.xpose.msra.mxu0 0
    %1111 = vmatprep.subr.bf16.mxu0 0
    %1112 = vmatpush1.bf16.xpose.msra.mxu0 0
    %1113 = vmatprep.subr.bf16.mxu0 0
    %1114 = vmatpush1.bf16.xpose.msra.mxu0 0
    %1115 = vmatprep.subr.bf16.mxu0 0
    %1116 = vmatpush1.bf16.xpose.msra.mxu0 0
    %1117 = vmatprep.subr.bf16.mxu0 0
    %1118 = vmatpush1.bf16.xpose.msra.mxu0 0
    %1119 = vmatprep.subr.bf16.mxu0 0
    %1120 = vmatpush1.bf16.xpose.msra.mxu0 0
    %1121 = vmatprep.subr.bf16.mxu0 0
    %1122 = vmatpush1.bf16.xpose.msra.mxu0 0
    %1123 = vmatprep.subr.bf16.mxu0 0
    %1124 = vmatpush1.bf16.xpose.msra.mxu0 0
    %1125 = vmatprep.subr.bf16.mxu0 0
    %1126 = vmatpush1.bf16.xpose.msra.mxu0 0
    %1127 = vmatprep.subr.bf16.mxu0 0
    %1128 = vmatpush1.bf16.xpose.msra.mxu0 0
    %1129 = vmatprep.subr.bf16.mxu0 0
    %1130 = vmatpush1.bf16.xpose.msra.mxu0 0
    %1131 = vmatprep.subr.bf16.mxu0 0
    %1132 = vmatpush1.bf16.xpose.msra.mxu0 0
    %1133 = vmatprep.subr.bf16.mxu0 0
    %1134 = vmatpush1.bf16.xpose.msra.mxu0 0
    %1135 = vmatprep.mubr.bf16.mxu0 0
    %1136 = vmatmul.mubr.bf16.gmra.mrb[0].mxu0 %v1098
    %v1137 = vpop.f32.mrb[0].mxu0
    %v1138 = vadd.f32 %v145, %v1137
    %v1139 = vpop.f32.mrb[0].mxu0
    %v1140 = vpop.f32.mrb[0].mxu0
    %v1141 = vpop.f32.mrb[0].mxu0
    %1142 = vdwg.mxu0
    %v1143 = vsel %vm150, %v1138, -inf
    %1144 = vmax.xlane.f32.xlu0 %v1143
    %v1145 = vpop.xlane.xlu0 %1144
    %v1146 = vsub.f32 %v1138, %v1145
    %v1147 = vmul.f32 %v1146, 1.442695
    %v1148 = vpow.pop %v1147
    %v1149 = vsel %vm150, %v1148, 0.0
    %1150 = vadd.xlane.f32.xlu0 %v1149
    %v1151 = vpop.xlane.xlu0 %1150
    %v1152 = vrcp.pop %v1151
    %v1153 = vmul.f32 %v1148, %v1152
    %v1154 = vpack.c.bf16 %v1153, %v1153
    %1155 = vrot.lane.b32.xlu0 %v786, 48
    %v1156 = vpop.permute.xlu0 %1155
    %v1158 = vsel %vm150, %v1154, 0
    %v1161 = vsel %vm214, %v1156, 0
    %1163 = vmatprep.subr.bf16.mxu0 0
    %1164 = vmatpush1.bf16.msra.mxu0 %v1161
    %1165 = vmatprep.subr.bf16.mxu0 0
    %1166 = vmatpush1.bf16.msra.mxu0 0
    %1167 = vmatprep.subr.bf16.mxu0 0
    %1168 = vmatpush1.bf16.msra.mxu0 0
    %1169 = vmatprep.subr.bf16.mxu0 0
    %1170 = vmatpush1.bf16.msra.mxu0 0
    %1171 = vmatprep.subr.bf16.mxu0 0
    %1172 = vmatpush1.bf16.msra.mxu0 0
    %1173 = vmatprep.subr.bf16.mxu0 0
    %1174 = vmatpush1.bf16.msra.mxu0 0
    %1175 = vmatprep.subr.bf16.mxu0 0
    %1176 = vmatpush1.bf16.msra.mxu0 0
    %1177 = vmatprep.subr.bf16.mxu0 0
    %1178 = vmatpush1.bf16.msra.mxu0 0
    %1179 = vmatprep.subr.bf16.mxu0 0
    %1180 = vmatpush1.bf16.msra.mxu0 0
    %1181 = vmatprep.subr.bf16.mxu0 0
    %1182 = vmatpush1.bf16.msra.mxu0 0
    %1183 = vmatprep.subr.bf16.mxu0 0
    %1184 = vmatpush1.bf16.msra.mxu0 0
    %1185 = vmatprep.subr.bf16.mxu0 0
    %1186 = vmatpush1.bf16.msra.mxu0 0
    %1187 = vmatprep.subr.bf16.mxu0 0
    %1188 = vmatpush1.bf16.msra.mxu0 0
    %1189 = vmatprep.subr.bf16.mxu0 0
    %1190 = vmatpush1.bf16.msra.mxu0 0
    %1191 = vmatprep.subr.bf16.mxu0 0
    %1192 = vmatpush1.bf16.msra.mxu0 0
    %1193 = vmatprep.subr.bf16.mxu0 0
    %1194 = vmatpush1.bf16.msra.mxu0 0
    %1195 = vmatprep.mubr.bf16.mxu0 0
    %1196 = vmatmul.mubr.bf16.gmra.mrb[0].mxu0 %v1158
    %v1197 = vpop.f32.mrb[0].mxu0
    %v1198 = vadd.f32 0.0, %v1197
    %v1199 = vpop.f32.mrb[0].mxu0
    %v1200 = vpop.f32.mrb[0].mxu0
    %v1201 = vpop.f32.mrb[0].mxu0
    %1202 = vdwg.mxu0
    %v1203 = vpack.c.bf16 %v1198, %v1198
    %v1205 = vsel %vm150, %v1203, 0
    %1207 = vmatprep.subr.bf16.mxu0 0
    %1208 = vmatpush1.bf16.msra.mxu0 %v577
    %1209 = vmatprep.subr.bf16.mxu0 0
    %1210 = vmatpush1.bf16.msra.mxu0 0
    %1211 = vmatprep.subr.bf16.mxu0 0
    %1212 = vmatpush1.bf16.msra.mxu0 0
    %1213 = vmatprep.subr.bf16.mxu0 0
    %1214 = vmatpush1.bf16.msra.mxu0 0
    %1215 = vmatprep.subr.bf16.mxu0 0
    %1216 = vmatpush1.bf16.msra.mxu0 0
    %1217 = vmatprep.subr.bf16.mxu0 0
    %1218 = vmatpush1.bf16.msra.mxu0 0
    %1219 = vmatprep.subr.bf16.mxu0 0
    %1220 = vmatpush1.bf16.msra.mxu0 0
    %1221 = vmatprep.subr.bf16.mxu0 0
    %1222 = vmatpush1.bf16.msra.mxu0 0
    %1223 = vmatprep.subr.bf16.mxu0 0
    %1224 = vmatpush1.bf16.msra.mxu0 0
    %1225 = vmatprep.subr.bf16.mxu0 0
    %1226 = vmatpush1.bf16.msra.mxu0 0
    %1227 = vmatprep.subr.bf16.mxu0 0
    %1228 = vmatpush1.bf16.msra.mxu0 0
    %1229 = vmatprep.subr.bf16.mxu0 0
    %1230 = vmatpush1.bf16.msra.mxu0 0
    %1231 = vmatprep.subr.bf16.mxu0 0
    %1232 = vmatpush1.bf16.msra.mxu0 0
    %1233 = vmatprep.subr.bf16.mxu0 0
    %1234 = vmatpush1.bf16.msra.mxu0 0
    %1235 = vmatprep.subr.bf16.mxu0 0
    %1236 = vmatpush1.bf16.msra.mxu0 0
    %1237 = vmatprep.subr.bf16.mxu0 0
    %1238 = vmatpush1.bf16.msra.mxu0 0
    %1239 = vmatprep.mubr.bf16.mxu0 0
    %1240 = vmatmul.mubr.bf16.gmra.mrb[0].mxu0 %v1205
    %v1241 = vpop.f32.mrb[0].mxu0
    %v1242 = vadd.f32 0.0, %v1241
    %v1243 = vpop.f32.mrb[0].mxu0
    %v1244 = vpop.f32.mrb[0].mxu0
    %v1245 = vpop.f32.mrb[0].mxu0
    %1246 = vdwg.mxu0
    %v1247 = vadd.f32 %v1088, %v1242
    %1248 = vrot.lane.b32.xlu0 %v786, 104
    %v1249 = vpop.permute.xlu0 %1248
    %1250 = vrot.lane.b32.xlu0 %v786, 72
    %v1251 = vpop.permute.xlu0 %1250
    %v1253 = vsel %vm150, %v1249, 0
    %v1256 = vsel %vm150, %v1251, 0
    %1258 = vmatprep.subr.bf16.mxu0 0
    %1259 = vmatpush1.bf16.xpose.msra.mxu0 %v1256
    %1260 = vmatprep.subr.bf16.mxu0 0
    %1261 = vmatpush1.bf16.xpose.msra.mxu0 0
    %1262 = vmatprep.subr.bf16.mxu0 0
    %1263 = vmatpush1.bf16.xpose.msra.mxu0 0
    %1264 = vmatprep.subr.bf16.mxu0 0
    %1265 = vmatpush1.bf16.xpose.msra.mxu0 0
    %1266 = vmatprep.subr.bf16.mxu0 0
    %1267 = vmatpush1.bf16.xpose.msra.mxu0 0
    %1268 = vmatprep.subr.bf16.mxu0 0
    %1269 = vmatpush1.bf16.xpose.msra.mxu0 0
    %1270 = vmatprep.subr.bf16.mxu0 0
    %1271 = vmatpush1.bf16.xpose.msra.mxu0 0
    %1272 = vmatprep.subr.bf16.mxu0 0
    %1273 = vmatpush1.bf16.xpose.msra.mxu0 0
    %1274 = vmatprep.subr.bf16.mxu0 0
    %1275 = vmatpush1.bf16.xpose.msra.mxu0 0
    %1276 = vmatprep.subr.bf16.mxu0 0
    %1277 = vmatpush1.bf16.xpose.msra.mxu0 0
    %1278 = vmatprep.subr.bf16.mxu0 0
    %1279 = vmatpush1.bf16.xpose.msra.mxu0 0
    %1280 = vmatprep.subr.bf16.mxu0 0
    %1281 = vmatpush1.bf16.xpose.msra.mxu0 0
    %1282 = vmatprep.subr.bf16.mxu0 0
    %1283 = vmatpush1.bf16.xpose.msra.mxu0 0
    %1284 = vmatprep.subr.bf16.mxu0 0
    %1285 = vmatpush1.bf16.xpose.msra.mxu0 0
    %1286 = vmatprep.subr.bf16.mxu0 0
    %1287 = vmatpush1.bf16.xpose.msra.mxu0 0
    %1288 = vmatprep.subr.bf16.mxu0 0
    %1289 = vmatpush1.bf16.xpose.msra.mxu0 0
    %1290 = vmatprep.mubr.bf16.mxu0 0
    %1291 = vmatmul.mubr.bf16.gmra.mrb[0].mxu0 %v1253
    %v1292 = vpop.f32.mrb[0].mxu0
    %v1293 = vadd.f32 %v145, %v1292
    %v1294 = vpop.f32.mrb[0].mxu0
    %v1295 = vpop.f32.mrb[0].mxu0
    %v1296 = vpop.f32.mrb[0].mxu0
    %1297 = vdwg.mxu0
    %v1298 = vsel %vm150, %v1293, -inf
    %1299 = vmax.xlane.f32.xlu0 %v1298
    %v1300 = vpop.xlane.xlu0 %1299
    %v1301 = vsub.f32 %v1293, %v1300
    %v1302 = vmul.f32 %v1301, 1.442695
    %v1303 = vpow.pop %v1302
    %v1304 = vsel %vm150, %v1303, 0.0
    %1305 = vadd.xlane.f32.xlu0 %v1304
    %v1306 = vpop.xlane.xlu0 %1305
    %v1307 = vrcp.pop %v1306
    %v1308 = vmul.f32 %v1303, %v1307
    %v1309 = vpack.c.bf16 %v1308, %v1308
    %1310 = vrot.lane.b32.xlu0 %v786, 40
    %v1311 = vpop.permute.xlu0 %1310
    %v1313 = vsel %vm150, %v1309, 0
    %v1316 = vsel %vm214, %v1311, 0
    %1318 = vmatprep.subr.bf16.mxu0 0
    %1319 = vmatpush1.bf16.msra.mxu0 %v1316
    %1320 = vmatprep.subr.bf16.mxu0 0
    %1321 = vmatpush1.bf16.msra.mxu0 0
    %1322 = vmatprep.subr.bf16.mxu0 0
    %1323 = vmatpush1.bf16.msra.mxu0 0
    %1324 = vmatprep.subr.bf16.mxu0 0
    %1325 = vmatpush1.bf16.msra.mxu0 0
    %1326 = vmatprep.subr.bf16.mxu0 0
    %1327 = vmatpush1.bf16.msra.mxu0 0
    %1328 = vmatprep.subr.bf16.mxu0 0
    %1329 = vmatpush1.bf16.msra.mxu0 0
    %1330 = vmatprep.subr.bf16.mxu0 0
    %1331 = vmatpush1.bf16.msra.mxu0 0
    %1332 = vmatprep.subr.bf16.mxu0 0
    %1333 = vmatpush1.bf16.msra.mxu0 0
    %1334 = vmatprep.subr.bf16.mxu0 0
    %1335 = vmatpush1.bf16.msra.mxu0 0
    %1336 = vmatprep.subr.bf16.mxu0 0
    %1337 = vmatpush1.bf16.msra.mxu0 0
    %1338 = vmatprep.subr.bf16.mxu0 0
    %1339 = vmatpush1.bf16.msra.mxu0 0
    %1340 = vmatprep.subr.bf16.mxu0 0
    %1341 = vmatpush1.bf16.msra.mxu0 0
    %1342 = vmatprep.subr.bf16.mxu0 0
    %1343 = vmatpush1.bf16.msra.mxu0 0
    %1344 = vmatprep.subr.bf16.mxu0 0
    %1345 = vmatpush1.bf16.msra.mxu0 0
    %1346 = vmatprep.subr.bf16.mxu0 0
    %1347 = vmatpush1.bf16.msra.mxu0 0
    %1348 = vmatprep.subr.bf16.mxu0 0
    %1349 = vmatpush1.bf16.msra.mxu0 0
    %1350 = vmatprep.mubr.bf16.mxu0 0
    %1351 = vmatmul.mubr.bf16.gmra.mrb[0].mxu0 %v1313
    %v1352 = vpop.f32.mrb[0].mxu0
    %v1353 = vadd.f32 0.0, %v1352
    %v1354 = vpop.f32.mrb[0].mxu0
    %v1355 = vpop.f32.mrb[0].mxu0
    %v1356 = vpop.f32.mrb[0].mxu0
    %1357 = vdwg.mxu0
    %v1358 = vpack.c.bf16 %v1353, %v1353
    %v1360 = vsel %vm150, %v1358, 0
    %1362 = vmatprep.subr.bf16.mxu0 0
    %1363 = vmatpush1.bf16.msra.mxu0 %v735
    %1364 = vmatprep.subr.bf16.mxu0 0
    %1365 = vmatpush1.bf16.msra.mxu0 0
    %1366 = vmatprep.subr.bf16.mxu0 0
    %1367 = vmatpush1.bf16.msra.mxu0 0
    %1368 = vmatprep.subr.bf16.mxu0 0
    %1369 = vmatpush1.bf16.msra.mxu0 0
    %1370 = vmatprep.subr.bf16.mxu0 0
    %1371 = vmatpush1.bf16.msra.mxu0 0
    %1372 = vmatprep.subr.bf16.mxu0 0
    %1373 = vmatpush1.bf16.msra.mxu0 0
    %1374 = vmatprep.subr.bf16.mxu0 0
    %1375 = vmatpush1.bf16.msra.mxu0 0
    %1376 = vmatprep.subr.bf16.mxu0 0
    %1377 = vmatpush1.bf16.msra.mxu0 0
    %1378 = vmatprep.subr.bf16.mxu0 0
    %1379 = vmatpush1.bf16.msra.mxu0 0
    %1380 = vmatprep.subr.bf16.mxu0 0
    %1381 = vmatpush1.bf16.msra.mxu0 0
    %1382 = vmatprep.subr.bf16.mxu0 0
    %1383 = vmatpush1.bf16.msra.mxu0 0
    %1384 = vmatprep.subr.bf16.mxu0 0
    %1385 = vmatpush1.bf16.msra.mxu0 0
    %1386 = vmatprep.subr.bf16.mxu0 0
    %1387 = vmatpush1.bf16.msra.mxu0 0
    %1388 = vmatprep.subr.bf16.mxu0 0
    %1389 = vmatpush1.bf16.msra.mxu0 0
    %1390 = vmatprep.subr.bf16.mxu0 0
    %1391 = vmatpush1.bf16.msra.mxu0 0
    %1392 = vmatprep.subr.bf16.mxu0 0
    %1393 = vmatpush1.bf16.msra.mxu0 0
    %1394 = vmatprep.mubr.bf16.mxu0 0
    %1395 = vmatmul.mubr.bf16.gmra.mrb[0].mxu0 %v1360
    %v1396 = vpop.f32.mrb[0].mxu0
    %v1397 = vadd.f32 0.0, %v1396
    %v1398 = vpop.f32.mrb[0].mxu0
    %v1399 = vpop.f32.mrb[0].mxu0
    %v1400 = vpop.f32.mrb[0].mxu0
    %1401 = vdwg.mxu0
    %v1402 = vadd.f32 %v1247, %v1397
    %v1403 = vadd.f32 %v1402, %v782
    %1404 = vst.msk [vmem:[#allocation8 + $0x8] sm:$0xff] %vm93, %v1403
    // Predicated region
    $region34: #{tpu_custom_call.1} parent=1 // pred_check
      _
    $region35: #{tpu_custom_call.1} parent=1 // pred_check_branch
      %1406 = sbr.rel (0) target = $region37
    $region36: #{tpu_custom_call.1} parent=1 // pred_region
      %s1408 = ssub.s32 256, 256
      %1409 = vsyncadd [#allocation4], %s1408
      %s1410 = sshll.u32 [#allocation8], 4
      %s1411 = int_to_ptr.vmem [resolvable:$true] %s1410
      %1416 = dma.vmem_to_hbm [thread:$0]  %s1411, 256, %s5, [#allocation4], 128, 128, 8
    $region37: #{tpu_custom_call.1} parent=1 // pred_fallthru
      _
    // Predicated region
    $region38: #{tpu_custom_call.1} parent=1 // pred_check
      _
    $region39: #{tpu_custom_call.1} parent=1 // pred_check_branch
      %1418 = sbr.rel (0) target = $region41
    $region40: #{tpu_custom_call.1} parent=1 // pred_region
      %1419 = dma.done [#allocation4], 256
    $region41: #{tpu_custom_call.1} parent=1 // pred_fallthru
      _
    %1420 = vsyncpa [#allocation3], 1
    %1421 = vsyncpa [#allocation6], 1
    %1422 = vsyncpa [#allocation4], 1

</llo_original>
